<compile_context>
chip_gen: v7x
topology: tpu7x:2x2x1
jax: 0.10.0
libtpu: 0.0.40
codegen_flags: <defaults>
</compile_context>

<pallas_src>
import functools

import jax
import jax.numpy as jnp
from jax import lax
from jax.experimental import pallas as pl
from jax.experimental.pallas import tpu as pltpu


_VMEM_LIMIT = 64 * 1024 * 1024   # explicit scoped-VMEM budget (safe on all gens)


# ----------------------------------------------------------------------------
# BlockSpec helper for grid-invariant operands (weights / bias)
# ----------------------------------------------------------------------------
def _weight_spec(shape, single_buffer):
    index_map = lambda *_: (0,) * len(shape)
    if single_buffer:
        # Constant index_map => never re-fetched; one buffer is enough.
        return pl.BlockSpec(shape, index_map, pipeline_mode=pl.Buffered(1))
    return pl.BlockSpec(shape, index_map)


# ----------------------------------------------------------------------------
# Kernel A: per (batch, N-tile) fused projections + attention, emits ctx^T
# ----------------------------------------------------------------------------
def _attn_kernel(xi_ref, xt_ref, wq_ref, wkv_ref, ctxT_ref, kv_ref, *,
                 scale, dim):
    C = dim
    j = pl.program_id(1)

    # K/V projection once per batch element; k^T / v^T stay resident in a
    # bf16 VMEM scratch across all N-tiles of this batch.
    @pl.when(j == 0)
    def _():
        xt = xt_ref[0].astype(jnp.bfloat16)                        # (M, C)
        # Stacked Wkv = [Wk; Wv]: kvT[i, m] = sum_c Wkv[i, c] * x_t[m, c]
        kvT = lax.dot_general(wkv_ref[...], xt, (((1,), (1,)), ((), ())),
                              preferred_element_type=jnp.float32)  # (2C, M)
        kv_ref[...] = kvT.astype(jnp.bfloat16)

    kT = kv_ref[:C, :]                                             # (C, M) bf16
    vT = kv_ref[C:, :]                                             # (C, M) bf16

    # q = (x_i @ Wq^T) * scale   (bf16 operands, f32 accumulation).
    xi = xi_ref[0].astype(jnp.bfloat16)                            # (tn, C)
    q = lax.dot_general(xi, wq_ref[...], (((1,), (1,)), ((), ())),
                        preferred_element_type=jnp.float32) * scale
    q = q.astype(jnp.bfloat16)                                     # (tn, C)

    # Logits + un-normalized softmax (f32 max/exp for stability).
    s = jnp.dot(q, kT, preferred_element_type=jnp.float32)         # (tn, M)
    m = jnp.max(s, axis=-1, keepdims=True)
    e = jnp.exp(s - m)                                             # (tn, M) f32

    # Row-sums as a tiny MXU matvec -> directly in (1, tn) layout.
    ones = jnp.ones((1, e.shape[1]), jnp.float32)
    denT = lax.dot_general(ones, e, (((1,), (1,)), ((), ())),
                           preferred_element_type=jnp.float32)     # (1, tn)
    r = pl.reciprocal(denT, approx=True)    # EUP slot (nearly free)
    r = r * (2.0 - denT * r)                # 1 Newton step -> ~1e-7 rel

    # Deferred normalization: ctx^T = v^T @ e^T, then scale columns by r.
    ctxT = lax.dot_general(vT, e.astype(jnp.bfloat16),
                           (((1,), (1,)), ((), ())),
                           preferred_element_type=jnp.float32)     # (C, tn)
    ctxT_ref[0] = (ctxT * r).astype(ctxT_ref.dtype)


# ----------------------------------------------------------------------------
# Kernel B: row-tiled output projection   out = y @ Wp^T + bp
# ----------------------------------------------------------------------------
def _proj_kernel(y_ref, wp_ref, bp_ref, o_ref):
    y = lax.dot_general(y_ref[...], wp_ref[...], (((1,), (1,)), ((), ())),
                        preferred_element_type=jnp.float32) + bp_ref[...]
    o_ref[...] = y.astype(o_ref.dtype)


# ----------------------------------------------------------------------------
# Tile selection
# ----------------------------------------------------------------------------
def _n_tile(n):
    """N-tile for Kernel A.  Either a 128-multiple divisor (keeps the x_i
    block sublane-aligned AND the ctx^T lane dim 128-aligned) or the full N
    (full dims are always legal; sub-128 N just takes masked stores)."""
    for t in (512, 256, 128):
        if n % t == 0 and n // t >= 2:
            return t
    return n


def _row_tile(rows):
    """Row tile for Kernel B: largest multiple-of-8 divisor <= 1024, preferring
    an even number of >=2 grid steps (both v7x cores busy every step)."""
    cands = [t for t in (1024, 512, 256, 128, 64, 32, 16, 8) if rows % t == 0]
    for t in cands:
        if rows // t >= 2 and (rows // t) % 2 == 0:
            return t
    for t in cands:
        if rows // t >= 2:
            return t
    return cands[0] if cands else rows


# ----------------------------------------------------------------------------
# Wrapper
# ----------------------------------------------------------------------------
def cross_attention(x_i, x_t, params, *, num_heads=8,
                    single_buffer_weights=True):
    B, N, C = x_i.shape
    _, M, _ = x_t.shape
    head_dim = C // num_heads
    scale = head_dim ** (-0.5)

    # bf16 MXU operands (f32 accumulation in-kernel).  Bias stays f32.
    wq = params["wq"].astype(jnp.bfloat16)                          # (C, C)
    wkv = jnp.concatenate([params["wk"], params["wv"]],
                          axis=0).astype(jnp.bfloat16)              # (2C, C)
    wp = params["wp"].astype(jnp.bfloat16)                          # (C, C)
    bp = params["bp"].astype(jnp.float32).reshape(1, C)

    tn = _n_tile(N)

    # --- Kernel A: attention context, transposed bf16 layout (B, C, N) -----
    ctxT = pl.pallas_call(
        functools.partial(_attn_kernel, scale=scale, dim=C),
        out_shape=jax.ShapeDtypeStruct((B, C, N), jnp.bfloat16),
        grid_spec=pltpu.PrefetchScalarGridSpec(
            num_scalar_prefetch=0,
            grid=(B, N // tn),
            in_specs=[
                pl.BlockSpec((1, tn, C), lambda b, j: (b, j, 0)),
                pl.BlockSpec((1, M, C), lambda b, j: (b, 0, 0)),
                _weight_spec((C, C), single_buffer_weights),
                _weight_spec((2 * C, C), single_buffer_weights),
            ],
            out_specs=pl.BlockSpec((1, C, tn), lambda b, j: (b, 0, j)),
            scratch_shapes=[pltpu.VMEM((2 * C, M), jnp.bfloat16)],
        ),
        compiler_params=pltpu.CompilerParams(
            dimension_semantics=("parallel", "arbitrary"),
            vmem_limit_bytes=_VMEM_LIMIT),
    )(x_i, x_t, wq, wkv)

    # PyTorch's `.transpose(1, 2).reshape(B, N, C)` scramble: Kernel A wrote
    # ctx^T contiguously as (B, C, N), so this is a metadata-only reshape
    # (no XLA transpose, no extra HBM copy).
    y = ctxT.reshape(B * N, C)

    # --- Kernel B: output projection over row tiles -------------------------
    rows = B * N
    tr = _row_tile(rows)
    out_flat = pl.pallas_call(
        _proj_kernel,
        out_shape=jax.ShapeDtypeStruct((rows, C), jnp.float32),
        grid_spec=pltpu.PrefetchScalarGridSpec(
            num_scalar_prefetch=0,
            grid=(rows // tr,),
            in_specs=[
                pl.BlockSpec((tr, C), lambda i: (i, 0)),
                _weight_spec((C, C), single_buffer_weights),
                _weight_spec((1, C), single_buffer_weights),
            ],
            out_specs=pl.BlockSpec((tr, C), lambda i: (i, 0)),
        ),
        compiler_params=pltpu.CompilerParams(
            dimension_semantics=("parallel",),
            vmem_limit_bytes=_VMEM_LIMIT),
    )(y, wp, bp)

    return out_flat.reshape(B, N, C)


# ----------------------------------------------------------------------------
# Pure-JAX reference (mirrors the PyTorch forward exactly, f32)
# ----------------------------------------------------------------------------
def cross_attention_ref(x_i, x_t, params, *, num_heads=8):
    B, N, C = x_i.shape
    head_dim = C // num_heads
    scale = head_dim ** (-0.5)
    q = x_i @ params["wq"].T
    k = x_t @ params["wk"].T
    v = x_t @ params["wv"].T
    attn = jax.nn.softmax((q @ jnp.swapaxes(k, -1, -2)) * scale, axis=-1)
    x = attn @ v
    x = jnp.reshape(jnp.swapaxes(x, 1, 2), (B, N, C))
    return x @ params["wp"].T + params["bp"]


if __name__ == "__main__":
    B, N, M, C = 2, 8, 16, 32          # dim=32, num_heads=8 -> head_dim=4
    num_heads = 8

    key = jax.random.PRNGKey(0)
    k_xi, k_xt, k_wq, k_wk, k_wv, k_wp, k_bp = jax.random.split(key, 7)

    x_i = jax.random.normal(k_xi, (B, N, C), dtype=jnp.float32)
    x_t = jax.random.normal(k_xt, (B, M, C), dtype=jnp.float32)

    params = {
        # nn.Linear weights: (out_features, in_features); qkv_bias=False default.
        "wq": 0.05 * jax.random.normal(k_wq, (C, C), dtype=jnp.float32),
        "wk": 0.05 * jax.random.normal(k_wk, (C, C), dtype=jnp.float32),
        "wv": 0.05 * jax.random.normal(k_wv, (C, C), dtype=jnp.float32),
        "wp": 0.05 * jax.random.normal(k_wp, (C, C), dtype=jnp.float32),
        "bp": 0.01 * jax.random.normal(k_bp, (C,), dtype=jnp.float32),
    }

    # Jit the wrapper so the reshape stays metadata-only and both pallas_calls
    # live in one XLA program.
    try:
        fwd = jax.jit(functools.partial(cross_attention, num_heads=num_heads))
        out = jax.block_until_ready(fwd(x_i, x_t, params))
    except Exception:
        # Fallback for JAX builds without BlockSpec pipeline_mode support:
        # identical kernels, default (double-buffered) weight specs.
        fwd = jax.jit(functools.partial(cross_attention, num_heads=num_heads,
                                        single_buffer_weights=False))
        out = jax.block_until_ready(fwd(x_i, x_t, params))

    ref = cross_attention_ref(x_i, x_t, params, num_heads=num_heads)
    assert out.shape == (B, N, C), out.shape
    # bf16 matmul operands + approx reciprocal => loosened (not 1e-4) tolerance.
    assert jnp.allclose(out, ref, atol=1e-2, rtol=1e-2), float(
        jnp.max(jnp.abs(out - ref)))

    print("KERNEL_OK")
</pallas_src>

<mosaic_0001>
module attributes {stable_mosaic.version = 11 : i64} {
  func.func @_attn_kernel(%arg0: i32, %arg1: i32, %arg2: memref<1x8x32xf32, #tpu.memory_space<vmem>>, %arg3: memref<1x16x32xf32, #tpu.memory_space<vmem>>, %arg4: memref<32x32xbf16, #tpu.memory_space<vmem>>, %arg5: memref<64x32xbf16, #tpu.memory_space<vmem>>, %arg6: memref<1x32x8xbf16, #tpu.memory_space<vmem>>, %arg7: memref<64x16xbf16, #tpu.memory_space<vmem>>) attributes {dimension_semantics = [#tpu.dimension_semantics<parallel>, #tpu.dimension_semantics<arbitrary>], iteration_bounds = array<i64: 2, 1>, scalar_prefetch = 0 : i64, scratch_operands = 1 : i64, tpu.core_type = #tpu.core_type<tc>, window_params = [{transform_indices = @transform_0, window_bounds = array<i64: 1, 8, 32>}, {transform_indices = @transform_1, window_bounds = array<i64: 1, 16, 32>}, {pipeline_mode = #tpu.pipeline_mode<synchronous>, transform_indices = @transform_2, window_bounds = array<i64: 32, 32>}, {pipeline_mode = #tpu.pipeline_mode<synchronous>, transform_indices = @transform_3, window_bounds = array<i64: 64, 32>}, {transform_indices = @transform_4, window_bounds = array<i64: 1, 32, 8>}]} {
    %c0_i32 = arith.constant 0 : i32
    %0 = arith.cmpi eq, %arg1, %c0_i32 : i32
    %1 = arith.extui %0 : i1 to i32
    %c0_i32_0 = arith.constant 0 : i32
    %2 = arith.cmpi ne, %1, %c0_i32_0 : i32
    scf.if %2 {
      %c0_18 = arith.constant 0 : index
      %c0_19 = arith.constant 0 : index
      %c0_20 = arith.constant 0 : index
      %34 = vector.load %arg3[%c0_18, %c0_19, %c0_20] : memref<1x16x32xf32, #tpu.memory_space<vmem>>, vector<1x16x32xf32>
      %35 = vector.shape_cast %34 : vector<1x16x32xf32> to vector<16x32xf32>
      %36 = arith.truncf %35 : vector<16x32xf32> to vector<16x32xbf16>
      %c0_21 = arith.constant 0 : index
      %c0_22 = arith.constant 0 : index
      %37 = vector.load %arg5[%c0_21, %c0_22] : memref<64x32xbf16, #tpu.memory_space<vmem>>, vector<64x32xbf16>
      %cst_23 = arith.constant dense<0.000000e+00> : vector<64x16xf32>
      %38 = tpu.matmul %37, %36, %cst_23 {dimension_numbers = #tpu.dot_dimension_numbers<[1], [1], [0], [0], [0, 0, 1, 0], [], []>} : vector<64x32xbf16>, vector<16x32xbf16>, vector<64x16xf32> -> vector<64x16xf32>
      %39 = arith.truncf %38 : vector<64x16xf32> to vector<64x16xbf16>
      %c0_24 = arith.constant 0 : index
      %c0_25 = arith.constant 0 : index
      %40 = vector.load %arg7[%c0_24, %c0_25] : memref<64x16xbf16, #tpu.memory_space<vmem>>, vector<64x16xbf16>
      tpu.vector_store %arg7[%c0_24, %c0_25], %39 {strides = array<i32>} : memref<64x16xbf16, #tpu.memory_space<vmem>>, vector<64x16xbf16>,
    } else {
    }
    %c0 = arith.constant 0 : index
    %c0_1 = arith.constant 0 : index
    %3 = vector.load %arg7[%c0, %c0_1] : memref<64x16xbf16, #tpu.memory_space<vmem>>, vector<32x16xbf16>
    %c32 = arith.constant 32 : index
    %c0_2 = arith.constant 0 : index
    %4 = vector.load %arg7[%c32, %c0_2] : memref<64x16xbf16, #tpu.memory_space<vmem>>, vector<32x16xbf16>
    %c0_3 = arith.constant 0 : index
    %c0_4 = arith.constant 0 : index
    %c0_5 = arith.constant 0 : index
    %5 = vector.load %arg2[%c0_3, %c0_4, %c0_5] : memref<1x8x32xf32, #tpu.memory_space<vmem>>, vector<1x8x32xf32>
    %6 = vector.shape_cast %5 : vector<1x8x32xf32> to vector<8x32xf32>
    %7 = arith.truncf %6 : vector<8x32xf32> to vector<8x32xbf16>
    %c0_6 = arith.constant 0 : index
    %c0_7 = arith.constant 0 : index
    %8 = vector.load %arg4[%c0_6, %c0_7] : memref<32x32xbf16, #tpu.memory_space<vmem>>, vector<32x32xbf16>
    %cst = arith.constant dense<0.000000e+00> : vector<8x32xf32>
    %9 = tpu.matmul %7, %8, %cst {dimension_numbers = #tpu.dot_dimension_numbers<[1], [1], [0], [0], [0, 0, 1, 0], [], []>} : vector<8x32xbf16>, vector<32x32xbf16>, vector<8x32xf32> -> vector<8x32xf32>
    %cst_8 = arith.constant 5.000000e-01 : f32
    %10 = vector.broadcast %cst_8 : f32 to vector<8x32xf32>
    %11 = arith.mulf %9, %10 : vector<8x32xf32>
    %12 = arith.truncf %11 : vector<8x32xf32> to vector<8x32xbf16>
    %cst_9 = arith.constant dense<0.000000e+00> : vector<8x16xf32>
    %13 = tpu.matmul %12, %3, %cst_9 {dimension_numbers = #tpu.dot_dimension_numbers<[1], [0], [0], [1], [0, 0, 1, 1], [], []>} : vector<8x32xbf16>, vector<32x16xbf16>, vector<8x16xf32> -> vector<8x16xf32>
    %cst_10 = arith.constant dense<0xFF800000> : vector<8xf32>
    %14 = vector.multi_reduction <maximumf>, %13, %cst_10 [1] : vector<8x16xf32> to vector<8xf32>
    %15 = vector.shape_cast %14 : vector<8xf32> to vector<8x1xf32>
    %16 = vector.broadcast %15 : vector<8x1xf32> to vector<8x16xf32>
    %17 = arith.subf %13, %16 : vector<8x16xf32>
    %18 = math.exp %17 : vector<8x16xf32>
    %cst_11 = arith.constant 1.000000e+00 : f32
    %19 = vector.broadcast %cst_11 : f32 to vector<1x16xf32>
    %cst_12 = arith.constant dense<0.000000e+00> : vector<1x8xf32>
    %20 = tpu.matmul %19, %18, %cst_12 {dimension_numbers = #tpu.dot_dimension_numbers<[1], [1], [0], [0], [0, 0, 1, 0], [], []>} : vector<1x16xf32>, vector<8x16xf32>, vector<1x8xf32> -> vector<1x8xf32>
    %21 = tpu.reciprocal %20 {approx = true} : vector<1x8xf32> -> vector<1x8xf32>
    %22 = arith.mulf %20, %21 : vector<1x8xf32>
    %cst_13 = arith.constant 2.000000e+00 : f32
    %23 = vector.broadcast %cst_13 : f32 to vector<1x8xf32>
    %24 = arith.subf %23, %22 : vector<1x8xf32>
    %25 = arith.mulf %21, %24 : vector<1x8xf32>
    %26 = arith.truncf %18 : vector<8x16xf32> to vector<8x16xbf16>
    %cst_14 = arith.constant dense<0.000000e+00> : vector<32x8xf32>
    %27 = tpu.matmul %4, %26, %cst_14 {dimension_numbers = #tpu.dot_dimension_numbers<[1], [1], [0], [0], [0, 0, 1, 0], [], []>} : vector<32x16xbf16>, vector<8x16xbf16>, vector<32x8xf32> -> vector<32x8xf32>
    %28 = vector.broadcast %25 : vector<1x8xf32> to vector<32x8xf32>
    %29 = arith.mulf %27, %28 : vector<32x8xf32>
    %30 = arith.truncf %29 : vector<32x8xf32> to vector<32x8xbf16>
    %c0_15 = arith.constant 0 : index
    %c0_16 = arith.constant 0 : index
    %c0_17 = arith.constant 0 : index
    %31 = vector.load %arg6[%c0_15, %c0_16, %c0_17] : memref<1x32x8xbf16, #tpu.memory_space<vmem>>, vector<1x32x8xbf16>
    %32 = vector.shape_cast %31 : vector<1x32x8xbf16> to vector<32x8xbf16>
    %33 = vector.shape_cast %30 : vector<32x8xbf16> to vector<1x32x8xbf16>
    tpu.vector_store %arg6[%c0_15, %c0_16, %c0_17], %33 {strides = array<i32>} : memref<1x32x8xbf16, #tpu.memory_space<vmem>>, vector<1x32x8xbf16>,
    return
  }
  func.func @transform_0(%arg0: i32, %arg1: i32) -> (i32, i32, i32) {
    %c0_i32 = arith.constant 0 : i32
    %c0_i32_0 = arith.constant 0 : i32
    return %arg0, %arg1, %c0_i32 : i32, i32, i32
  }
  func.func @transform_1(%arg0: i32, %arg1: i32) -> (i32, i32, i32) {
    %c0_i32 = arith.constant 0 : i32
    %c0_i32_0 = arith.constant 0 : i32
    %c0_i32_1 = arith.constant 0 : i32
    return %arg0, %c0_i32, %c0_i32_0 : i32, i32, i32
  }
  func.func @transform_2(%arg0: i32, %arg1: i32) -> (i32, i32) {
    %c0_i32 = arith.constant 0 : i32
    %c0_i32_0 = arith.constant 0 : i32
    %c0_i32_1 = arith.constant 0 : i32
    return %c0_i32, %c0_i32_0 : i32, i32
  }
  func.func @transform_3(%arg0: i32, %arg1: i32) -> (i32, i32) {
    %c0_i32 = arith.constant 0 : i32
    %c0_i32_0 = arith.constant 0 : i32
    %c0_i32_1 = arith.constant 0 : i32
    return %c0_i32, %c0_i32_0 : i32, i32
  }
  func.func @transform_4(%arg0: i32, %arg1: i32) -> (i32, i32, i32) {
    %c0_i32 = arith.constant 0 : i32
    %c0_i32_0 = arith.constant 0 : i32
    return %arg0, %c0_i32, %arg1 : i32, i32, i32
  }
}

module attributes {stable_mosaic.version = 11 : i64} {
  func.func @_proj_kernel(%arg0: i32, %arg1: memref<8x32xbf16, #tpu.memory_space<vmem>>, %arg2: memref<32x32xbf16, #tpu.memory_space<vmem>>, %arg3: memref<1x32xf32, #tpu.memory_space<vmem>>, %arg4: memref<8x32xf32, #tpu.memory_space<vmem>>) attributes {dimension_semantics = [#tpu.dimension_semantics<parallel>], iteration_bounds = array<i64: 2>, scalar_prefetch = 0 : i64, scratch_operands = 0 : i64, tpu.core_type = #tpu.core_type<tc>, window_params = [{transform_indices = @transform_0, window_bounds = array<i64: 8, 32>}, {pipeline_mode = #tpu.pipeline_mode<synchronous>, transform_indices = @transform_1, window_bounds = array<i64: 32, 32>}, {pipeline_mode = #tpu.pipeline_mode<synchronous>, transform_indices = @transform_2, window_bounds = array<i64: 1, 32>}, {transform_indices = @transform_3, window_bounds = array<i64: 8, 32>}]} {
    %c0 = arith.constant 0 : index
    %c0_0 = arith.constant 0 : index
    %0 = vector.load %arg1[%c0, %c0_0] : memref<8x32xbf16, #tpu.memory_space<vmem>>, vector<8x32xbf16>
    %c0_1 = arith.constant 0 : index
    %c0_2 = arith.constant 0 : index
    %1 = vector.load %arg2[%c0_1, %c0_2] : memref<32x32xbf16, #tpu.memory_space<vmem>>, vector<32x32xbf16>
    %cst = arith.constant dense<0.000000e+00> : vector<8x32xf32>
    %2 = tpu.matmul %0, %1, %cst {dimension_numbers = #tpu.dot_dimension_numbers<[1], [1], [0], [0], [0, 0, 1, 0], [], []>} : vector<8x32xbf16>, vector<32x32xbf16>, vector<8x32xf32> -> vector<8x32xf32>
    %c0_3 = arith.constant 0 : index
    %c0_4 = arith.constant 0 : index
    %3 = vector.load %arg3[%c0_3, %c0_4] : memref<1x32xf32, #tpu.memory_space<vmem>>, vector<1x32xf32>
    %4 = vector.broadcast %3 : vector<1x32xf32> to vector<8x32xf32>
    %5 = arith.addf %2, %4 : vector<8x32xf32>
    %c0_5 = arith.constant 0 : index
    %c0_6 = arith.constant 0 : index
    %6 = vector.load %arg4[%c0_5, %c0_6] : memref<8x32xf32, #tpu.memory_space<vmem>>, vector<8x32xf32>
    tpu.vector_store %arg4[%c0_5, %c0_6], %5 {strides = array<i32>} : memref<8x32xf32, #tpu.memory_space<vmem>>, vector<8x32xf32>,
    return
  }
  func.func @transform_0(%arg0: i32) -> (i32, i32) {
    %c0_i32 = arith.constant 0 : i32
    %c0_i32_0 = arith.constant 0 : i32
    return %arg0, %c0_i32 : i32, i32
  }
  func.func @transform_1(%arg0: i32) -> (i32, i32) {
    %c0_i32 = arith.constant 0 : i32
    %c0_i32_0 = arith.constant 0 : i32
    %c0_i32_1 = arith.constant 0 : i32
    return %c0_i32, %c0_i32_0 : i32, i32
  }
  func.func @transform_2(%arg0: i32) -> (i32, i32) {
    %c0_i32 = arith.constant 0 : i32
    %c0_i32_0 = arith.constant 0 : i32
    %c0_i32_1 = arith.constant 0 : i32
    return %c0_i32, %c0_i32_0 : i32, i32
  }
  func.func @transform_3(%arg0: i32) -> (i32, i32) {
    %c0_i32 = arith.constant 0 : i32
    %c0_i32_0 = arith.constant 0 : i32
    return %arg0, %c0_i32 : i32, i32
  }
}

module attributes {stable_mosaic.version = 11 : i64} {
  func.func @_attn_kernel(%arg0: i32, %arg1: i32, %arg2: memref<1x8x32xf32, #tpu.memory_space<vmem>>, %arg3: memref<1x16x32xf32, #tpu.memory_space<vmem>>, %arg4: memref<32x32xbf16, #tpu.memory_space<vmem>>, %arg5: memref<64x32xbf16, #tpu.memory_space<vmem>>, %arg6: memref<1x32x8xbf16, #tpu.memory_space<vmem>>, %arg7: memref<64x16xbf16, #tpu.memory_space<vmem>>) attributes {dimension_semantics = [#tpu.dimension_semantics<parallel>, #tpu.dimension_semantics<arbitrary>], iteration_bounds = array<i64: 2, 1>, scalar_prefetch = 0 : i64, scratch_operands = 1 : i64, tpu.core_type = #tpu.core_type<tc>, window_params = [{transform_indices = @transform_0, window_bounds = array<i64: 1, 8, 32>}, {transform_indices = @transform_1, window_bounds = array<i64: 1, 16, 32>}, {pipeline_mode = #tpu.pipeline_mode<synchronous>, transform_indices = @transform_2, window_bounds = array<i64: 32, 32>}, {pipeline_mode = #tpu.pipeline_mode<synchronous>, transform_indices = @transform_3, window_bounds = array<i64: 64, 32>}, {transform_indices = @transform_4, window_bounds = array<i64: 1, 32, 8>}]} {
    %c0_i32 = arith.constant 0 : i32
    %0 = arith.cmpi eq, %arg1, %c0_i32 : i32
    %1 = arith.extui %0 : i1 to i32
    %c0_i32_0 = arith.constant 0 : i32
    %2 = arith.cmpi ne, %1, %c0_i32_0 : i32
    scf.if %2 {
      %c0_18 = arith.constant 0 : index
      %c0_19 = arith.constant 0 : index
      %c0_20 = arith.constant 0 : index
      %34 = vector.load %arg3[%c0_18, %c0_19, %c0_20] : memref<1x16x32xf32, #tpu.memory_space<vmem>>, vector<1x16x32xf32>
      %35 = vector.shape_cast %34 : vector<1x16x32xf32> to vector<16x32xf32>
      %36 = arith.truncf %35 : vector<16x32xf32> to vector<16x32xbf16>
      %c0_21 = arith.constant 0 : index
      %c0_22 = arith.constant 0 : index
      %37 = vector.load %arg5[%c0_21, %c0_22] : memref<64x32xbf16, #tpu.memory_space<vmem>>, vector<64x32xbf16>
      %cst_23 = arith.constant dense<0.000000e+00> : vector<64x16xf32>
      %38 = tpu.matmul %37, %36, %cst_23 {dimension_numbers = #tpu.dot_dimension_numbers<[1], [1], [0], [0], [0, 0, 1, 0], [], []>} : vector<64x32xbf16>, vector<16x32xbf16>, vector<64x16xf32> -> vector<64x16xf32>
      %39 = arith.truncf %38 : vector<64x16xf32> to vector<64x16xbf16>
      %c0_24 = arith.constant 0 : index
      %c0_25 = arith.constant 0 : index
      %40 = vector.load %arg7[%c0_24, %c0_25] : memref<64x16xbf16, #tpu.memory_space<vmem>>, vector<64x16xbf16>
      tpu.vector_store %arg7[%c0_24, %c0_25], %39 {strides = array<i32>} : memref<64x16xbf16, #tpu.memory_space<vmem>>, vector<64x16xbf16>,
    } else {
    }
    %c0 = arith.constant 0 : index
    %c0_1 = arith.constant 0 : index
    %3 = vector.load %arg7[%c0, %c0_1] : memref<64x16xbf16, #tpu.memory_space<vmem>>, vector<32x16xbf16>
    %c32 = arith.constant 32 : index
    %c0_2 = arith.constant 0 : index
    %4 = vector.load %arg7[%c32, %c0_2] : memref<64x16xbf16, #tpu.memory_space<vmem>>, vector<32x16xbf16>
    %c0_3 = arith.constant 0 : index
    %c0_4 = arith.constant 0 : index
    %c0_5 = arith.constant 0 : index
    %5 = vector.load %arg2[%c0_3, %c0_4, %c0_5] : memref<1x8x32xf32, #tpu.memory_space<vmem>>, vector<1x8x32xf32>
    %6 = vector.shape_cast %5 : vector<1x8x32xf32> to vector<8x32xf32>
    %7 = arith.truncf %6 : vector<8x32xf32> to vector<8x32xbf16>
    %c0_6 = arith.constant 0 : index
    %c0_7 = arith.constant 0 : index
    %8 = vector.load %arg4[%c0_6, %c0_7] : memref<32x32xbf16, #tpu.memory_space<vmem>>, vector<32x32xbf16>
    %cst = arith.constant dense<0.000000e+00> : vector<8x32xf32>
    %9 = tpu.matmul %7, %8, %cst {dimension_numbers = #tpu.dot_dimension_numbers<[1], [1], [0], [0], [0, 0, 1, 0], [], []>} : vector<8x32xbf16>, vector<32x32xbf16>, vector<8x32xf32> -> vector<8x32xf32>
    %cst_8 = arith.constant 5.000000e-01 : f32
    %10 = vector.broadcast %cst_8 : f32 to vector<8x32xf32>
    %11 = arith.mulf %9, %10 : vector<8x32xf32>
    %12 = arith.truncf %11 : vector<8x32xf32> to vector<8x32xbf16>
    %cst_9 = arith.constant dense<0.000000e+00> : vector<8x16xf32>
    %13 = tpu.matmul %12, %3, %cst_9 {dimension_numbers = #tpu.dot_dimension_numbers<[1], [0], [0], [1], [0, 0, 1, 1], [], []>} : vector<8x32xbf16>, vector<32x16xbf16>, vector<8x16xf32> -> vector<8x16xf32>
    %cst_10 = arith.constant dense<0xFF800000> : vector<8xf32>
    %14 = vector.multi_reduction <maximumf>, %13, %cst_10 [1] : vector<8x16xf32> to vector<8xf32>
    %15 = vector.shape_cast %14 : vector<8xf32> to vector<8x1xf32>
    %16 = vector.broadcast %15 : vector<8x1xf32> to vector<8x16xf32>
    %17 = arith.subf %13, %16 : vector<8x16xf32>
    %18 = math.exp %17 : vector<8x16xf32>
    %cst_11 = arith.constant 1.000000e+00 : f32
    %19 = vector.broadcast %cst_11 : f32 to vector<1x16xf32>
    %cst_12 = arith.constant dense<0.000000e+00> : vector<1x8xf32>
    %20 = tpu.matmul %19, %18, %cst_12 {dimension_numbers = #tpu.dot_dimension_numbers<[1], [1], [0], [0], [0, 0, 1, 0], [], []>} : vector<1x16xf32>, vector<8x16xf32>, vector<1x8xf32> -> vector<1x8xf32>
    %21 = tpu.reciprocal %20 {approx = true} : vector<1x8xf32> -> vector<1x8xf32>
    %22 = arith.mulf %20, %21 : vector<1x8xf32>
    %cst_13 = arith.constant 2.000000e+00 : f32
    %23 = vector.broadcast %cst_13 : f32 to vector<1x8xf32>
    %24 = arith.subf %23, %22 : vector<1x8xf32>
    %25 = arith.mulf %21, %24 : vector<1x8xf32>
    %26 = arith.truncf %18 : vector<8x16xf32> to vector<8x16xbf16>
    %cst_14 = arith.constant dense<0.000000e+00> : vector<32x8xf32>
    %27 = tpu.matmul %4, %26, %cst_14 {dimension_numbers = #tpu.dot_dimension_numbers<[1], [1], [0], [0], [0, 0, 1, 0], [], []>} : vector<32x16xbf16>, vector<8x16xbf16>, vector<32x8xf32> -> vector<32x8xf32>
    %28 = vector.broadcast %25 : vector<1x8xf32> to vector<32x8xf32>
    %29 = arith.mulf %27, %28 : vector<32x8xf32>
    %30 = arith.truncf %29 : vector<32x8xf32> to vector<32x8xbf16>
    %c0_15 = arith.constant 0 : index
    %c0_16 = arith.constant 0 : index
    %c0_17 = arith.constant 0 : index
    %31 = vector.load %arg6[%c0_15, %c0_16, %c0_17] : memref<1x32x8xbf16, #tpu.memory_space<vmem>>, vector<1x32x8xbf16>
    %32 = vector.shape_cast %31 : vector<1x32x8xbf16> to vector<32x8xbf16>
    %33 = vector.shape_cast %30 : vector<32x8xbf16> to vector<1x32x8xbf16>
    tpu.vector_store %arg6[%c0_15, %c0_16, %c0_17], %33 {strides = array<i32>} : memref<1x32x8xbf16, #tpu.memory_space<vmem>>, vector<1x32x8xbf16>,
    return
  }
  func.func @transform_0(%arg0: i32, %arg1: i32) -> (i32, i32, i32) {
    %c0_i32 = arith.constant 0 : i32
    %c0_i32_0 = arith.constant 0 : i32
    return %arg0, %arg1, %c0_i32 : i32, i32, i32
  }
  func.func @transform_1(%arg0: i32, %arg1: i32) -> (i32, i32, i32) {
    %c0_i32 = arith.constant 0 : i32
    %c0_i32_0 = arith.constant 0 : i32
    %c0_i32_1 = arith.constant 0 : i32
    return %arg0, %c0_i32, %c0_i32_0 : i32, i32, i32
  }
  func.func @transform_2(%arg0: i32, %arg1: i32) -> (i32, i32) {
    %c0_i32 = arith.constant 0 : i32
    %c0_i32_0 = arith.constant 0 : i32
    %c0_i32_1 = arith.constant 0 : i32
    return %c0_i32, %c0_i32_0 : i32, i32
  }
  func.func @transform_3(%arg0: i32, %arg1: i32) -> (i32, i32) {
    %c0_i32 = arith.constant 0 : i32
    %c0_i32_0 = arith.constant 0 : i32
    %c0_i32_1 = arith.constant 0 : i32
    return %c0_i32, %c0_i32_0 : i32, i32
  }
  func.func @transform_4(%arg0: i32, %arg1: i32) -> (i32, i32, i32) {
    %c0_i32 = arith.constant 0 : i32
    %c0_i32_0 = arith.constant 0 : i32
    return %arg0, %c0_i32, %arg1 : i32, i32, i32
  }
}

module attributes {stable_mosaic.version = 11 : i64} {
  func.func @_proj_kernel(%arg0: i32, %arg1: memref<8x32xbf16, #tpu.memory_space<vmem>>, %arg2: memref<32x32xbf16, #tpu.memory_space<vmem>>, %arg3: memref<1x32xf32, #tpu.memory_space<vmem>>, %arg4: memref<8x32xf32, #tpu.memory_space<vmem>>) attributes {dimension_semantics = [#tpu.dimension_semantics<parallel>], iteration_bounds = array<i64: 2>, scalar_prefetch = 0 : i64, scratch_operands = 0 : i64, tpu.core_type = #tpu.core_type<tc>, window_params = [{transform_indices = @transform_0, window_bounds = array<i64: 8, 32>}, {pipeline_mode = #tpu.pipeline_mode<synchronous>, transform_indices = @transform_1, window_bounds = array<i64: 32, 32>}, {pipeline_mode = #tpu.pipeline_mode<synchronous>, transform_indices = @transform_2, window_bounds = array<i64: 1, 32>}, {transform_indices = @transform_3, window_bounds = array<i64: 8, 32>}]} {
    %c0 = arith.constant 0 : index
    %c0_0 = arith.constant 0 : index
    %0 = vector.load %arg1[%c0, %c0_0] : memref<8x32xbf16, #tpu.memory_space<vmem>>, vector<8x32xbf16>
    %c0_1 = arith.constant 0 : index
    %c0_2 = arith.constant 0 : index
    %1 = vector.load %arg2[%c0_1, %c0_2] : memref<32x32xbf16, #tpu.memory_space<vmem>>, vector<32x32xbf16>
    %cst = arith.constant dense<0.000000e+00> : vector<8x32xf32>
    %2 = tpu.matmul %0, %1, %cst {dimension_numbers = #tpu.dot_dimension_numbers<[1], [1], [0], [0], [0, 0, 1, 0], [], []>} : vector<8x32xbf16>, vector<32x32xbf16>, vector<8x32xf32> -> vector<8x32xf32>
    %c0_3 = arith.constant 0 : index
    %c0_4 = arith.constant 0 : index
    %3 = vector.load %arg3[%c0_3, %c0_4] : memref<1x32xf32, #tpu.memory_space<vmem>>, vector<1x32xf32>
    %4 = vector.broadcast %3 : vector<1x32xf32> to vector<8x32xf32>
    %5 = arith.addf %2, %4 : vector<8x32xf32>
    %c0_5 = arith.constant 0 : index
    %c0_6 = arith.constant 0 : index
    %6 = vector.load %arg4[%c0_5, %c0_6] : memref<8x32xf32, #tpu.memory_space<vmem>>, vector<8x32xf32>
    tpu.vector_store %arg4[%c0_5, %c0_6], %5 {strides = array<i32>} : memref<8x32xf32, #tpu.memory_space<vmem>>, vector<8x32xf32>,
    return
  }
  func.func @transform_0(%arg0: i32) -> (i32, i32) {
    %c0_i32 = arith.constant 0 : i32
    %c0_i32_0 = arith.constant 0 : i32
    return %arg0, %c0_i32 : i32, i32
  }
  func.func @transform_1(%arg0: i32) -> (i32, i32) {
    %c0_i32 = arith.constant 0 : i32
    %c0_i32_0 = arith.constant 0 : i32
    %c0_i32_1 = arith.constant 0 : i32
    return %c0_i32, %c0_i32_0 : i32, i32
  }
  func.func @transform_2(%arg0: i32) -> (i32, i32) {
    %c0_i32 = arith.constant 0 : i32
    %c0_i32_0 = arith.constant 0 : i32
    %c0_i32_1 = arith.constant 0 : i32
    return %c0_i32, %c0_i32_0 : i32, i32
  }
  func.func @transform_3(%arg0: i32) -> (i32, i32) {
    %c0_i32 = arith.constant 0 : i32
    %c0_i32_0 = arith.constant 0 : i32
    return %arg0, %c0_i32 : i32, i32
  }
}

</mosaic_0001>

<llo_original>
// kernel: cross_attention.3
$region0: #{cross_attention.3}
  #allocation0 [shape = 'u32[]', space=smem, size = 0x4, offset = 0x4, fixed_abs, tag = 'smem constant byte address 0x4 - core index']
  #allocation1 [shape = 'u32[144,128]{1,0:T(1,128)}', space=vmem, size = 0x12000, scoped, tag = 'internal scratch']
  %s0 = inlined_call_operand.hbm [shape: bf16[16,32], index: 0, kind: input, shape index: {}]
  %s1 = inlined_call_operand.hbm [shape: bf16[32,32], index: 1, kind: input, shape index: {}]
  %s2 = inlined_call_operand.hbm [shape: f32[1,32], index: 2, kind: input, shape index: {}]
  %s3 = inlined_call_operand.hbm [shape: f32[16,32], index: 3, kind: output, shape index: {}]
  %s4 = sld [smem:[#allocation0]]
  $region57: #{cross_attention.3} parent=0
    _
  %s6 = ssub.s32 1, %s4
  %s7 = scalar_select 0, %s6, %s4
  $region1: #{cross_attention.3} parent=0
    #allocation2 [shape = 'u8[4096]{0}', space=vmem, size = 0x1000, scoped, tag = 'input window, operand 0']
    #allocation3 [shape = 's32[2]{0}', space=sflag, size = 0x8, scoped, tag = 'scoped memory for cross_attention.3']
    #allocation4 [shape = 's32[2]{0}', space=sflag, size = 0x8, scoped, tag = 'scoped memory for cross_attention.3']
    #allocation5 [shape = 'u8[8192]{0}', space=vmem, size = 0x2000, scoped, tag = 'input window, operand 1, single buffered']
    #allocation6 [shape = 's32[1]{0}', space=sflag, size = 0x4, scoped, tag = 'scoped memory for cross_attention.3']
    #allocation7 [shape = 'u8[512]{0}', space=vmem, size = 0x400, scoped, tag = 'input window, operand 2, single buffered']
    #allocation8 [shape = 'u8[8192]{0}', space=vmem, size = 0x2000, scoped, tag = 'output window, operand 0']
    %8 = vsyncpa [#allocation3], 0
    %s9 = scalar_lea.sflag [#allocation3], 1
    %10 = vsyncpa %s9, 0
    %11 = vsyncpa [#allocation6], 0
    %12 = vsyncpa [#allocation4], 0
    %s13 = scalar_lea.sflag [#allocation4], 1
    %14 = vsyncpa %s13, 0
    loop: start=0, step=1, limit=4
    $region2: #{cross_attention.3} parent=1 // loop_pre_header
      _
    $region3: #{cross_attention.3} parent=1 // loop_header
      %s16 = sphi 0, %s20
      %p17 = scmp.ge.s32.totalorder %s16, 4
      %s26 = sphi 0, %s28
      %s29 = sphi 0, %s26
      %s30 = sphi 0, %s29
      %s46 = sphi 0, %s30
      %s50 = sphi 0, %s50
      %s52 = sphi 0, %s50
      %s53 = sphi 0, %s52
      %s67 = sphi 0, %s53
      %s71 = sphi 0, %s71
      %s73 = sphi 0, %s71
      %s74 = sphi 0, %s73
      %s88 = sphi 0, %s74
      %s94 = sphi 0, %s96
      %s97 = sphi 0, %s94
      %s98 = sphi 0, %s97
      %s114 = sphi 0, %s98
    $region4: #{cross_attention.3} parent=1 // loop_header_branch
      %19 = sbr.rel (%p17) target = $region8
    $region5: #{cross_attention.3} parent=1 // loop_body
      %s21 = ssub.s32 %s16, 1
      %s22 = ssub.s32 %s16, 2
      %s23 = sadd.s32 %s16, 1
      %s24 = ssub.s32 %s16, %s23
      %p25 = scmp.eq.s32.totalorder %s24, 0
      %s27 = sadd.s32 %s26, 1
      %s28 = scalar_select %p25, %s26, %s27
      %p31 = pneg %p25
      %p32 = scmp.eq.s32.totalorder %s16, 1
      %p33 = por %p31, %p32
      %p34 = scmp.ne.s32.totalorder %s26, %s29
      %p35 = scmp.eq.s32.totalorder %s16, 0
      %p36 = por %p34, %p35
      %p37 = scmp.ne.s32.totalorder %s26, %s29
      %p38 = scmp.eq.s32.totalorder %s21, 1
      %p39 = por %p37, %p38
      %p40 = scmp.ne.s32.totalorder %s29, %s30
      %p41 = scmp.eq.s32.totalorder %s21, 0
      %p42 = por %p40, %p41
      %p43 = scmp.ne.s32.totalorder %s29, %s30
      %p44 = scmp.eq.s32.totalorder %s22, 1
      %p45 = por %p43, %p44
      %p47 = scmp.ne.s32.totalorder %s30, %s46
      %p48 = scmp.eq.s32.totalorder %s22, 0
      %p49 = por %p47, %p48
      %s51 = sadd.s32 %s50, 1
      %p54 = scmp.eq.s32.totalorder %s16, 1
      %p55 = scmp.ne.s32.totalorder %s50, %s52
      %p56 = scmp.eq.s32.totalorder %s16, 0
      %p57 = por %p55, %p56
      %p58 = scmp.ne.s32.totalorder %s50, %s52
      %p59 = scmp.eq.s32.totalorder %s21, 1
      %p60 = por %p58, %p59
      %p61 = scmp.ne.s32.totalorder %s52, %s53
      %p62 = scmp.eq.s32.totalorder %s21, 0
      %p63 = por %p61, %p62
      %p64 = scmp.ne.s32.totalorder %s52, %s53
      %p65 = scmp.eq.s32.totalorder %s22, 1
      %p66 = por %p64, %p65
      %p68 = scmp.ne.s32.totalorder %s53, %s67
      %p69 = scmp.eq.s32.totalorder %s22, 0
      %p70 = por %p68, %p69
      %s72 = sadd.s32 %s71, 1
      %p75 = scmp.eq.s32.totalorder %s16, 1
      %p76 = scmp.ne.s32.totalorder %s71, %s73
      %p77 = scmp.eq.s32.totalorder %s16, 0
      %p78 = por %p76, %p77
      %p79 = scmp.ne.s32.totalorder %s71, %s73
      %p80 = scmp.eq.s32.totalorder %s21, 1
      %p81 = por %p79, %p80
      %p82 = scmp.ne.s32.totalorder %s73, %s74
      %p83 = scmp.eq.s32.totalorder %s21, 0
      %p84 = por %p82, %p83
      %p85 = scmp.ne.s32.totalorder %s73, %s74
      %p86 = scmp.eq.s32.totalorder %s22, 1
      %p87 = por %p85, %p86
      %p89 = scmp.ne.s32.totalorder %s74, %s88
      %p90 = scmp.eq.s32.totalorder %s22, 0
      %p91 = por %p89, %p90
      %s92 = ssub.s32 %s16, %s23
      %p93 = scmp.eq.s32.totalorder %s92, 0
      %s95 = sadd.s32 %s94, 1
      %s96 = scalar_select %p93, %s94, %s95
      %p99 = pneg %p93
      %p100 = scmp.eq.s32.totalorder %s16, 1
      %p101 = por %p99, %p100
      %p102 = scmp.ne.s32.totalorder %s94, %s97
      %p103 = scmp.eq.s32.totalorder %s16, 0
      %p104 = por %p102, %p103
      %p105 = scmp.ne.s32.totalorder %s94, %s97
      %p106 = scmp.eq.s32.totalorder %s21, 1
      %p107 = por %p105, %p106
      %p108 = scmp.ne.s32.totalorder %s97, %s98
      %p109 = scmp.eq.s32.totalorder %s21, 0
      %p110 = por %p108, %p109
      %p111 = scmp.ne.s32.totalorder %s97, %s98
      %p112 = scmp.eq.s32.totalorder %s22, 1
      %p113 = por %p111, %p112
      %p115 = scmp.ne.s32.totalorder %s98, %s114
      %p116 = scmp.eq.s32.totalorder %s22, 0
      %p117 = por %p115, %p116
      %p118 = scmp.le.s32.totalorder 1, %s16
      %p119 = scmp.lt.s32.totalorder %s16, 3
      %p120 = pnand %p118, %p119
      %p121 = pneg %p120
      // Predicated region
      $region9: #{cross_attention.3} parent=5 // pred_check
        _
      $region10: #{cross_attention.3} parent=5 // pred_check_branch
        %123 = sbr.rel (%p120) target = $region12
      $region11: #{cross_attention.3} parent=5 // pred_region
        %s124 = ssub.s32 %s16, 1
        // Predicated region
        $region13: #{cross_attention.3} parent=11 // pred_check
          %p125 = pneg %p63
        $region14: #{cross_attention.3} parent=11 // pred_check_branch
          %127 = sbr.rel (%p125) target = $region16
        $region15: #{cross_attention.3} parent=11 // pred_region
          %s129 = ssub.s32 256, 256
          %130 = vsyncadd [#allocation6], %s129
          %s131 = sshll.u32 [#allocation5], 4
          %s132 = int_to_ptr.vmem [resolvable:$true] %s131
          %137 = dma.hbm_to_vmem [thread:$0]  %s1, 256, %s132, [#allocation6], 64, 64, 4
        $region16: #{cross_attention.3} parent=11 // pred_fallthru
          _
        // Predicated region
        $region17: #{cross_attention.3} parent=11 // pred_check
          %p138 = pneg %p84
        $region18: #{cross_attention.3} parent=11 // pred_check_branch
          %140 = sbr.rel (%p138) target = $region20
        $region19: #{cross_attention.3} parent=11 // pred_region
          %s142 = ssub.s32 16, 16
          %143 = vsyncadd [#allocation6], %s142
          %s145 = sshll.u32 [#allocation7], 4
          %s146 = int_to_ptr.vmem [resolvable:$true] %s145
          %148 = dma.hbm_to_vmem [thread:$0]  %s2, 16, %s146, [#allocation6]
        $region20: #{cross_attention.3} parent=11 // pred_fallthru
          _
      $region12: #{cross_attention.3} parent=5 // pred_fallthru
        _
      %p149 = scmp.lt.s32.totalorder %s16, 2
      // Predicated region
      $region21: #{cross_attention.3} parent=5 // pred_check
        %p150 = pneg %p149
      $region22: #{cross_attention.3} parent=5 // pred_check_branch
        %152 = sbr.rel (%p150) target = $region24
      $region23: #{cross_attention.3} parent=5 // pred_region
        // Predicated region
        $region25: #{cross_attention.3} parent=23 // pred_check
          %p153 = pneg %p36
        $region26: #{cross_attention.3} parent=23 // pred_check_branch
          %155 = sbr.rel (%p153) target = $region28
        $region27: #{cross_attention.3} parent=23 // pred_region
          %s156 = sand.u32 %s26, 1
          %s157 = scalar_lea.sflag [#allocation3], %s156
          %s158 = sand.u32 %s26, 1
          %s159 = smul.addr %s158, 4
          %s160 = scalar_lea.vmem [#allocation2], %s159
          %s162 = ssub.s32 64, 64
          %163 = vsyncadd %s157, %s162
          %s164 = smul.addr %s16, 64
          %s165 = scalar_lea.hbm %s0, %s164
          %s167 = sshll.u32 %s160, 4
          %s168 = int_to_ptr.vmem [resolvable:$true] %s167
          %170 = dma.hbm_to_vmem [thread:$0]  %s165, 64, %s168, %s157
        $region28: #{cross_attention.3} parent=23 // pred_fallthru
          _
      $region24: #{cross_attention.3} parent=5 // pred_fallthru
        _
      %p171 = scmp.le.s32.totalorder 1, %s16
      %p172 = scmp.lt.s32.totalorder %s16, 3
      %p173 = pnand %p171, %p172
      %p174 = pneg %p173
      // Predicated region
      $region29: #{cross_attention.3} parent=5 // pred_check
        _
      $region30: #{cross_attention.3} parent=5 // pred_check_branch
        %176 = sbr.rel (%p173) target = $region32
      $region31: #{cross_attention.3} parent=5 // pred_region
        %s177 = ssub.s32 %s16, 1
        %s178 = sand.u32 %s29, 1
        %s179 = scalar_lea.sflag [#allocation3], %s178
        %s180 = sand.u32 %s29, 1
        %s181 = smul.addr %s180, 4
        %s182 = scalar_lea.vmem [#allocation2], %s181
        // Predicated region
        $region33: #{cross_attention.3} parent=31 // pred_check
          %p183 = pneg %p42
        $region34: #{cross_attention.3} parent=31 // pred_check_branch
          %185 = sbr.rel (%p183) target = $region36
        $region35: #{cross_attention.3} parent=31 // pred_region
          %186 = dma.done %s179, 64
        $region36: #{cross_attention.3} parent=31 // pred_fallthru
          _
        // Predicated region
        $region37: #{cross_attention.3} parent=31 // pred_check
          %p187 = pneg %p63
        $region38: #{cross_attention.3} parent=31 // pred_check_branch
          %189 = sbr.rel (%p187) target = $region40
        $region39: #{cross_attention.3} parent=31 // pred_region
          %190 = dma.done [#allocation6], 256
        $region40: #{cross_attention.3} parent=31 // pred_fallthru
          _
        // Predicated region
        $region41: #{cross_attention.3} parent=31 // pred_check
          %p191 = pneg %p84
        $region42: #{cross_attention.3} parent=31 // pred_check_branch
          %193 = sbr.rel (%p191) target = $region44
        $region43: #{cross_attention.3} parent=31 // pred_region
          %194 = dma.done [#allocation6], 16
        $region44: #{cross_attention.3} parent=31 // pred_fallthru
          _
        %s195 = sand.u32 %s29, 1
        %s196 = scalar_lea.sflag [#allocation3], %s195
        %s197 = sand.u32 %s29, 1
        %s198 = smul.addr %s197, 4
        %s199 = scalar_lea.vmem [#allocation2], %s198
        %p200 = pneg %p42
        %p201 = pneg %p39
        %p202 = pneg %p63
        %p203 = pneg %p60
        %p204 = pneg %p84
        %p205 = pneg %p81
        %p206 = pneg %p110
        %p207 = pneg %p107
        %s208 = sand.u32 %s97, 1
        %s209 = scalar_lea.sflag [#allocation4], %s208
        %s210 = sand.u32 %s97, 1
        %s211 = smul.addr %s210, 8
        %s212 = scalar_lea.vmem [#allocation8], %s211
        %v214 = vld [vmem:[%s182] sm:$0xf]
        %v215 = vld [vmem:[#allocation5] sm:$0xf]
        %v216 = vld [vmem:[#allocation5 + $0x4] sm:$0xf]
        %v217 = vld [vmem:[#allocation5 + $0x8] sm:$0xf]
        %v218 = vld [vmem:[#allocation5 + $0xc] sm:$0xf]
        %v219 = vld [vmem:[#allocation7] sm:$0x1]
        %v221 = vlaneseq
        %v222 = vshrl.u32 %v221, 7
        %v223 = vsub.s32 0, %v222
        %v224 = vrot.slane %v219, %v223
        %v230 = vunpack.c.l.b16 %v215
        %v231 = vunpack.c.l.b16 %v216
        %v232 = vunpack.c.l.b16 %v217
        %v233 = vunpack.c.l.b16 %v218
        %v234 = vpack.c.b16 %v231, %v230
        %v235 = vpack.c.b16 %v233, %v232
        %vm236 = vcmask 261120
        %v238 = vsel %vm236, %v214, 0
        %v241 = vsel %vm236, %v234, 0
        %v244 = vsel %vm236, %v235, 0
        %246 = vmatprep.subr.bf16.mxu0 0
        %247 = vmatpush1.bf16.xpose.msra.mxu0 %v241
        %248 = vmatprep.subr.bf16.mxu0 0
        %249 = vmatpush1.bf16.xpose.msra.mxu0 %v244
        %250 = vmatprep.subr.bf16.mxu0 0
        %251 = vmatpush1.bf16.xpose.msra.mxu0 0
        %252 = vmatprep.subr.bf16.mxu0 0
        %253 = vmatpush1.bf16.xpose.msra.mxu0 0
        %254 = vmatprep.subr.bf16.mxu0 0
        %255 = vmatpush1.bf16.xpose.msra.mxu0 0
        %256 = vmatprep.subr.bf16.mxu0 0
        %257 = vmatpush1.bf16.xpose.msra.mxu0 0
        %258 = vmatprep.subr.bf16.mxu0 0
        %259 = vmatpush1.bf16.xpose.msra.mxu0 0
        %260 = vmatprep.subr.bf16.mxu0 0
        %261 = vmatpush1.bf16.xpose.msra.mxu0 0
        %262 = vmatprep.subr.bf16.mxu0 0
        %263 = vmatpush1.bf16.xpose.msra.mxu0 0
        %264 = vmatprep.subr.bf16.mxu0 0
        %265 = vmatpush1.bf16.xpose.msra.mxu0 0
        %266 = vmatprep.subr.bf16.mxu0 0
        %267 = vmatpush1.bf16.xpose.msra.mxu0 0
        %268 = vmatprep.subr.bf16.mxu0 0
        %269 = vmatpush1.bf16.xpose.msra.mxu0 0
        %270 = vmatprep.subr.bf16.mxu0 0
        %271 = vmatpush1.bf16.xpose.msra.mxu0 0
        %272 = vmatprep.subr.bf16.mxu0 0
        %273 = vmatpush1.bf16.xpose.msra.mxu0 0
        %274 = vmatprep.subr.bf16.mxu0 0
        %275 = vmatpush1.bf16.xpose.msra.mxu0 0
        %276 = vmatprep.subr.bf16.mxu0 0
        %277 = vmatpush1.bf16.xpose.msra.mxu0 0
        %278 = vmatprep.mubr.bf16.mxu0 0
        %279 = vmatmul.mubr.bf16.gmra.mrb[0].mxu0 %v238
        %v280 = vpop.f32.mrb[0].mxu0
        %v281 = vadd.f32 %v224, %v280
        %v282 = vpop.f32.mrb[0].mxu0
        %v283 = vpop.f32.mrb[0].mxu0
        %v284 = vpop.f32.mrb[0].mxu0
        %285 = vdwg.mxu0
        %286 = vst.msk [vmem:[%s212] sm:$0xff] %vm236, %v281
        %s287 = sand.u32 %s97, 1
        %s288 = scalar_lea.sflag [#allocation4], %s287
        %s289 = sand.u32 %s97, 1
        %s290 = smul.addr %s289, 8
        %s291 = scalar_lea.vmem [#allocation8], %s290
        // Predicated region
        $region45: #{cross_attention.3} parent=31 // pred_check
          %p292 = pneg %p107
        $region46: #{cross_attention.3} parent=31 // pred_check_branch
          %294 = sbr.rel (%p292) target = $region48
        $region47: #{cross_attention.3} parent=31 // pred_region
          %s296 = ssub.s32 128, 128
          %297 = vsyncadd %s288, %s296
          %s298 = smul.addr %s21, 128
          %s299 = scalar_lea.hbm %s3, %s298
          %s301 = sshll.u32 %s291, 4
          %s302 = int_to_ptr.vmem [resolvable:$true] %s301
          %304 = dma.vmem_to_hbm [thread:$0]  %s302, 128, %s299, %s288
        $region48: #{cross_attention.3} parent=31 // pred_fallthru
          _
      $region32: #{cross_attention.3} parent=5 // pred_fallthru
        _
      %p305 = scmp.le.s32.totalorder 2, %s16
      // Predicated region
      $region49: #{cross_attention.3} parent=5 // pred_check
        %p306 = pneg %p305
      $region50: #{cross_attention.3} parent=5 // pred_check_branch
        %308 = sbr.rel (%p306) target = $region52
      $region51: #{cross_attention.3} parent=5 // pred_region
        %s309 = ssub.s32 %s16, 2
        // Predicated region
        $region53: #{cross_attention.3} parent=51 // pred_check
          %p310 = pneg %p113
        $region54: #{cross_attention.3} parent=51 // pred_check_branch
          %312 = sbr.rel (%p310) target = $region56
        $region55: #{cross_attention.3} parent=51 // pred_region
          %s313 = sand.u32 %s98, 1
          %s314 = scalar_lea.sflag [#allocation4], %s313
          %s315 = sand.u32 %s98, 1
          %s316 = smul.addr %s315, 8
          %s317 = scalar_lea.vmem [#allocation8], %s316
          %318 = dma.done %s314, 128
        $region56: #{cross_attention.3} parent=51 // pred_fallthru
          _
      $region52: #{cross_attention.3} parent=5 // pred_fallthru
        _
    $region6: #{cross_attention.3} parent=1 // loop_footer
      %s20 = sadd.s32 1, %s16
    $region7: #{cross_attention.3} parent=1 // loop_footer_branch
      %15 = sbr.rel target = $region3
    $region8: #{cross_attention.3} parent=1 // loop_exit
      _
    %319 = vsyncpa [#allocation3], 1
    %s320 = scalar_lea.sflag [#allocation3], 1
    %321 = vsyncpa %s320, 1
    %322 = vsyncpa [#allocation6], 1
    %323 = vsyncpa [#allocation4], 1
    %s324 = scalar_lea.sflag [#allocation4], 1
    %325 = vsyncpa %s324, 1

// kernel: cross_attention.2
$region0: #{cross_attention.2}
  #allocation0 [shape = 'u32[]', space=smem, size = 0x4, offset = 0x4, fixed_abs, tag = 'smem constant byte address 0x4 - core index']
  #allocation1 [shape = 'u32[144,128]{1,0:T(1,128)}', space=vmem, size = 0x12000, scoped, tag = 'internal scratch']
  #allocation2 [shape = 'bf16[64,16]{1,0:T(16,128)(2,1)}', space=vmem, size = 0x4000, scoped, tag = 'scratch operand']
  %s0 = inlined_call_operand.hbm [shape: f32[2,8,32], index: 0, kind: input, shape index: {}]
  %s1 = inlined_call_operand.hbm [shape: f32[2,16,32], index: 1, kind: input, shape index: {}]
  %s2 = inlined_call_operand.hbm [shape: bf16[32,32], index: 2, kind: input, shape index: {}]
  %s3 = inlined_call_operand.hbm [shape: bf16[64,32], index: 3, kind: input, shape index: {}]
  %s4 = inlined_call_operand.hbm [shape: bf16[2,32,8], index: 4, kind: output, shape index: {}]
  %s5 = sld [smem:[#allocation0]]
  $region69: #{cross_attention.2} parent=0
    _
  %s7 = ssub.s32 1, %s5
  %s8 = scalar_select 0, %s7, %s5
  $region1: #{cross_attention.2} parent=0
    #allocation3 [shape = 'u8[8192]{0}', space=vmem, size = 0x2000, scoped, tag = 'input window, operand 0']
    #allocation4 [shape = 's32[2]{0}', space=sflag, size = 0x8, scoped, tag = 'scoped memory for cross_attention.2']
    #allocation5 [shape = 's32[2]{0}', space=sflag, size = 0x8, scoped, tag = 'scoped memory for cross_attention.2']
    #allocation6 [shape = 'u8[16384]{0}', space=vmem, size = 0x4000, scoped, tag = 'input window, operand 1']
    #allocation7 [shape = 's32[2]{0}', space=sflag, size = 0x8, scoped, tag = 'scoped memory for cross_attention.2']
    #allocation8 [shape = 'u8[8192]{0}', space=vmem, size = 0x2000, scoped, tag = 'input window, operand 2, single buffered']
    #allocation9 [shape = 'u8[16384]{0}', space=vmem, size = 0x4000, scoped, tag = 'input window, operand 3, single buffered']
    #allocation10 [shape = 's32[1]{0}', space=sflag, size = 0x4, scoped, tag = 'scoped memory for cross_attention.2']
    #allocation11 [shape = 'u8[16384]{0}', space=vmem, size = 0x4000, scoped, tag = 'output window, operand 0']
    %9 = vsyncpa [#allocation4], 0
    %s10 = scalar_lea.sflag [#allocation4], 1
    %11 = vsyncpa %s10, 0
    %12 = vsyncpa [#allocation7], 0
    %s13 = scalar_lea.sflag [#allocation7], 1
    %14 = vsyncpa %s13, 0
    %15 = vsyncpa [#allocation10], 0
    %16 = vsyncpa [#allocation5], 0
    %s17 = scalar_lea.sflag [#allocation5], 1
    %18 = vsyncpa %s17, 0
    loop: start=0, step=1, limit=4
    $region2: #{cross_attention.2} parent=1 // loop_pre_header
      _
    $region3: #{cross_attention.2} parent=1 // loop_header
      %s20 = sphi 0, %s24
      %p21 = scmp.ge.s32.totalorder %s20, 4
      %s27 = sphi 0, %s39
      %s28 = sphi 0, %s35
      %s29 = sphi 0, %s27
      %s30 = sphi 0, %s28
      %s31 = sphi 0, %s29
      %s32 = sphi 0, %s30
      %s44 = sphi 0, %s46
      %s47 = sphi 0, %s44
      %s48 = sphi 0, %s47
      %s64 = sphi 0, %s48
      %s70 = sphi 0, %s72
      %s73 = sphi 0, %s70
      %s74 = sphi 0, %s73
      %s90 = sphi 0, %s74
      %s94 = sphi 0, %s94
      %s96 = sphi 0, %s94
      %s97 = sphi 0, %s96
      %s111 = sphi 0, %s97
      %s115 = sphi 0, %s115
      %s117 = sphi 0, %s115
      %s118 = sphi 0, %s117
      %s132 = sphi 0, %s118
      %s140 = sphi 0, %s142
      %s143 = sphi 0, %s140
      %s144 = sphi 0, %s143
      %s160 = sphi 0, %s144
    $region4: #{cross_attention.2} parent=1 // loop_header_branch
      %23 = sbr.rel (%p21) target = $region8
    $region5: #{cross_attention.2} parent=1 // loop_body
      %s25 = ssub.s32 %s20, 1
      %s26 = ssub.s32 %s20, 2
      %s33 = sadd.s32 1, %s28
      %p34 = scmp.ge.s32.totalorder %s33, 1
      %s35 = scalar_select %p34, 0, %s33
      %s36 = sadd.s32 1, %s27
      %s37 = scalar_select %p34, %s36, %s27
      %p38 = scmp.ge.s32.totalorder %s37, 2
      %s39 = scalar_select %p38, 0, %s37
      %s40 = ssub.s32 %s27, %s39
      %s41 = ssub.s32 %s28, %s35
      %s42 = sor.u32 %s40, %s41
      %p43 = scmp.eq.s32.totalorder %s42, 0
      %s45 = sadd.s32 %s44, 1
      %s46 = scalar_select %p43, %s44, %s45
      %p49 = pneg %p43
      %p50 = scmp.eq.s32.totalorder %s20, 1
      %p51 = por %p49, %p50
      %p52 = scmp.ne.s32.totalorder %s44, %s47
      %p53 = scmp.eq.s32.totalorder %s20, 0
      %p54 = por %p52, %p53
      %p55 = scmp.ne.s32.totalorder %s44, %s47
      %p56 = scmp.eq.s32.totalorder %s25, 1
      %p57 = por %p55, %p56
      %p58 = scmp.ne.s32.totalorder %s47, %s48
      %p59 = scmp.eq.s32.totalorder %s25, 0
      %p60 = por %p58, %p59
      %p61 = scmp.ne.s32.totalorder %s47, %s48
      %p62 = scmp.eq.s32.totalorder %s26, 1
      %p63 = por %p61, %p62
      %p65 = scmp.ne.s32.totalorder %s48, %s64
      %p66 = scmp.eq.s32.totalorder %s26, 0
      %p67 = por %p65, %p66
      %s68 = ssub.s32 %s27, %s39
      %p69 = scmp.eq.s32.totalorder %s68, 0
      %s71 = sadd.s32 %s70, 1
      %s72 = scalar_select %p69, %s70, %s71
      %p75 = pneg %p69
      %p76 = scmp.eq.s32.totalorder %s20, 1
      %p77 = por %p75, %p76
      %p78 = scmp.ne.s32.totalorder %s70, %s73
      %p79 = scmp.eq.s32.totalorder %s20, 0
      %p80 = por %p78, %p79
      %p81 = scmp.ne.s32.totalorder %s70, %s73
      %p82 = scmp.eq.s32.totalorder %s25, 1
      %p83 = por %p81, %p82
      %p84 = scmp.ne.s32.totalorder %s73, %s74
      %p85 = scmp.eq.s32.totalorder %s25, 0
      %p86 = por %p84, %p85
      %p87 = scmp.ne.s32.totalorder %s73, %s74
      %p88 = scmp.eq.s32.totalorder %s26, 1
      %p89 = por %p87, %p88
      %p91 = scmp.ne.s32.totalorder %s74, %s90
      %p92 = scmp.eq.s32.totalorder %s26, 0
      %p93 = por %p91, %p92
      %s95 = sadd.s32 %s94, 1
      %p98 = scmp.eq.s32.totalorder %s20, 1
      %p99 = scmp.ne.s32.totalorder %s94, %s96
      %p100 = scmp.eq.s32.totalorder %s20, 0
      %p101 = por %p99, %p100
      %p102 = scmp.ne.s32.totalorder %s94, %s96
      %p103 = scmp.eq.s32.totalorder %s25, 1
      %p104 = por %p102, %p103
      %p105 = scmp.ne.s32.totalorder %s96, %s97
      %p106 = scmp.eq.s32.totalorder %s25, 0
      %p107 = por %p105, %p106
      %p108 = scmp.ne.s32.totalorder %s96, %s97
      %p109 = scmp.eq.s32.totalorder %s26, 1
      %p110 = por %p108, %p109
      %p112 = scmp.ne.s32.totalorder %s97, %s111
      %p113 = scmp.eq.s32.totalorder %s26, 0
      %p114 = por %p112, %p113
      %s116 = sadd.s32 %s115, 1
      %p119 = scmp.eq.s32.totalorder %s20, 1
      %p120 = scmp.ne.s32.totalorder %s115, %s117
      %p121 = scmp.eq.s32.totalorder %s20, 0
      %p122 = por %p120, %p121
      %p123 = scmp.ne.s32.totalorder %s115, %s117
      %p124 = scmp.eq.s32.totalorder %s25, 1
      %p125 = por %p123, %p124
      %p126 = scmp.ne.s32.totalorder %s117, %s118
      %p127 = scmp.eq.s32.totalorder %s25, 0
      %p128 = por %p126, %p127
      %p129 = scmp.ne.s32.totalorder %s117, %s118
      %p130 = scmp.eq.s32.totalorder %s26, 1
      %p131 = por %p129, %p130
      %p133 = scmp.ne.s32.totalorder %s118, %s132
      %p134 = scmp.eq.s32.totalorder %s26, 0
      %p135 = por %p133, %p134
      %s136 = ssub.s32 %s27, %s39
      %s137 = ssub.s32 %s28, %s35
      %s138 = sor.u32 %s136, %s137
      %p139 = scmp.eq.s32.totalorder %s138, 0
      %s141 = sadd.s32 %s140, 1
      %s142 = scalar_select %p139, %s140, %s141
      %p145 = pneg %p139
      %p146 = scmp.eq.s32.totalorder %s20, 1
      %p147 = por %p145, %p146
      %p148 = scmp.ne.s32.totalorder %s140, %s143
      %p149 = scmp.eq.s32.totalorder %s20, 0
      %p150 = por %p148, %p149
      %p151 = scmp.ne.s32.totalorder %s140, %s143
      %p152 = scmp.eq.s32.totalorder %s25, 1
      %p153 = por %p151, %p152
      %p154 = scmp.ne.s32.totalorder %s143, %s144
      %p155 = scmp.eq.s32.totalorder %s25, 0
      %p156 = por %p154, %p155
      %p157 = scmp.ne.s32.totalorder %s143, %s144
      %p158 = scmp.eq.s32.totalorder %s26, 1
      %p159 = por %p157, %p158
      %p161 = scmp.ne.s32.totalorder %s144, %s160
      %p162 = scmp.eq.s32.totalorder %s26, 0
      %p163 = por %p161, %p162
      %p164 = scmp.le.s32.totalorder 1, %s20
      %p165 = scmp.lt.s32.totalorder %s20, 3
      %p166 = pnand %p164, %p165
      %p167 = pneg %p166
      // Predicated region
      $region9: #{cross_attention.2} parent=5 // pred_check
        _
      $region10: #{cross_attention.2} parent=5 // pred_check_branch
        %169 = sbr.rel (%p166) target = $region12
      $region11: #{cross_attention.2} parent=5 // pred_region
        %s170 = ssub.s32 %s20, 1
        // Predicated region
        $region13: #{cross_attention.2} parent=11 // pred_check
          %p171 = pneg %p107
        $region14: #{cross_attention.2} parent=11 // pred_check_branch
          %173 = sbr.rel (%p171) target = $region16
        $region15: #{cross_attention.2} parent=11 // pred_region
          %s175 = ssub.s32 256, 256
          %176 = vsyncadd [#allocation7], %s175
          %s177 = sshll.u32 [#allocation8], 4
          %s178 = int_to_ptr.vmem [resolvable:$true] %s177
          %183 = dma.hbm_to_vmem [thread:$0]  %s2, 256, %s178, [#allocation7], 64, 64, 4
        $region16: #{cross_attention.2} parent=11 // pred_fallthru
          _
        // Predicated region
        $region17: #{cross_attention.2} parent=11 // pred_check
          %p184 = pneg %p128
        $region18: #{cross_attention.2} parent=11 // pred_check_branch
          %186 = sbr.rel (%p184) target = $region20
        $region19: #{cross_attention.2} parent=11 // pred_region
          %s188 = ssub.s32 512, 512
          %189 = vsyncadd [#allocation10], %s188
          %s190 = sshll.u32 [#allocation9], 4
          %s191 = int_to_ptr.vmem [resolvable:$true] %s190
          %196 = dma.hbm_to_vmem [thread:$0]  %s3, 512, %s191, [#allocation10], 64, 64, 4
        $region20: #{cross_attention.2} parent=11 // pred_fallthru
          _
      $region12: #{cross_attention.2} parent=5 // pred_fallthru
        _
      %p197 = scmp.lt.s32.totalorder %s20, 2
      // Predicated region
      $region21: #{cross_attention.2} parent=5 // pred_check
        %p198 = pneg %p197
      $region22: #{cross_attention.2} parent=5 // pred_check_branch
        %200 = sbr.rel (%p198) target = $region24
      $region23: #{cross_attention.2} parent=5 // pred_region
        // Predicated region
        $region25: #{cross_attention.2} parent=23 // pred_check
          %p201 = pneg %p54
        $region26: #{cross_attention.2} parent=23 // pred_check_branch
          %203 = sbr.rel (%p201) target = $region28
        $region27: #{cross_attention.2} parent=23 // pred_region
          %s204 = sand.u32 %s44, 1
          %s205 = scalar_lea.sflag [#allocation4], %s204
          %s206 = sand.u32 %s44, 1
          %s207 = smul.addr %s206, 8
          %s208 = scalar_lea.vmem [#allocation3], %s207
          %s210 = ssub.s32 128, 128
          %211 = vsyncadd %s205, %s210
          %s212 = sadd.s32 %s28, %s27
          %s213 = smul.addr %s212, 128
          %s214 = scalar_lea.hbm %s0, %s213
          %s216 = sshll.u32 %s208, 4
          %s217 = int_to_ptr.vmem [resolvable:$true] %s216
          %219 = dma.hbm_to_vmem [thread:$0]  %s214, 128, %s217, %s205
        $region28: #{cross_attention.2} parent=23 // pred_fallthru
          _
        // Predicated region
        $region29: #{cross_attention.2} parent=23 // pred_check
          %p220 = pneg %p80
        $region30: #{cross_attention.2} parent=23 // pred_check_branch
          %222 = sbr.rel (%p220) target = $region32
        $region31: #{cross_attention.2} parent=23 // pred_region
          %s223 = sand.u32 %s20, 1
          %s224 = scalar_lea.sflag [#allocation7], %s223
          %s225 = sand.u32 %s70, 1
          %s226 = smul.addr %s225, 16
          %s227 = scalar_lea.vmem [#allocation6], %s226
          %s229 = ssub.s32 256, 256
          %230 = vsyncadd %s224, %s229
          %s231 = smul.addr %s27, 2
          %s232 = smul.addr %s231, 128
          %s233 = scalar_lea.hbm %s1, %s232
          %s234 = sshll.u32 %s227, 4
          %s235 = int_to_ptr.vmem [resolvable:$true] %s234
          %240 = dma.hbm_to_vmem [thread:$0]  %s233, 256, %s235, %s224, 128, 128, 8
        $region32: #{cross_attention.2} parent=23 // pred_fallthru
          _
      $region24: #{cross_attention.2} parent=5 // pred_fallthru
        _
      %p241 = scmp.le.s32.totalorder 1, %s20
      %p242 = scmp.lt.s32.totalorder %s20, 3
      %p243 = pnand %p241, %p242
      %p244 = pneg %p243
      // Predicated region
      $region33: #{cross_attention.2} parent=5 // pred_check
        _
      $region34: #{cross_attention.2} parent=5 // pred_check_branch
        %246 = sbr.rel (%p243) target = $region36
      $region35: #{cross_attention.2} parent=5 // pred_region
        %s247 = ssub.s32 %s20, 1
        %s248 = sand.u32 %s47, 1
        %s249 = scalar_lea.sflag [#allocation4], %s248
        %s250 = sand.u32 %s47, 1
        %s251 = smul.addr %s250, 8
        %s252 = scalar_lea.vmem [#allocation3], %s251
        // Predicated region
        $region37: #{cross_attention.2} parent=35 // pred_check
          %p253 = pneg %p60
        $region38: #{cross_attention.2} parent=35 // pred_check_branch
          %255 = sbr.rel (%p253) target = $region40
        $region39: #{cross_attention.2} parent=35 // pred_region
          %256 = dma.done %s249, 128
        $region40: #{cross_attention.2} parent=35 // pred_fallthru
          _
        %s257 = sand.u32 %s25, 1
        %s258 = scalar_lea.sflag [#allocation7], %s257
        %s259 = sand.u32 %s73, 1
        %s260 = smul.addr %s259, 16
        %s261 = scalar_lea.vmem [#allocation6], %s260
        // Predicated region
        $region41: #{cross_attention.2} parent=35 // pred_check
          %p262 = pneg %p86
        $region42: #{cross_attention.2} parent=35 // pred_check_branch
          %264 = sbr.rel (%p262) target = $region44
        $region43: #{cross_attention.2} parent=35 // pred_region
          %265 = dma.done %s258, 256
        $region44: #{cross_attention.2} parent=35 // pred_fallthru
          _
        // Predicated region
        $region45: #{cross_attention.2} parent=35 // pred_check
          %p266 = pneg %p107
        $region46: #{cross_attention.2} parent=35 // pred_check_branch
          %268 = sbr.rel (%p266) target = $region48
        $region47: #{cross_attention.2} parent=35 // pred_region
          %269 = dma.done [#allocation7], 256
        $region48: #{cross_attention.2} parent=35 // pred_fallthru
          _
        // Predicated region
        $region49: #{cross_attention.2} parent=35 // pred_check
          %p270 = pneg %p128
        $region50: #{cross_attention.2} parent=35 // pred_check_branch
          %272 = sbr.rel (%p270) target = $region52
        $region51: #{cross_attention.2} parent=35 // pred_region
          %273 = dma.done [#allocation10], 512
        $region52: #{cross_attention.2} parent=35 // pred_fallthru
          _
        %s274 = sand.u32 %s47, 1
        %s275 = scalar_lea.sflag [#allocation4], %s274
        %s276 = sand.u32 %s47, 1
        %s277 = smul.addr %s276, 8
        %s278 = scalar_lea.vmem [#allocation3], %s277
        %p279 = pneg %p60
        %p280 = pneg %p57
        %s281 = sand.u32 %s25, 1
        %s282 = scalar_lea.sflag [#allocation7], %s281
        %s283 = sand.u32 %s73, 1
        %s284 = smul.addr %s283, 16
        %s285 = scalar_lea.vmem [#allocation6], %s284
        %p286 = pneg %p86
        %p287 = pneg %p83
        %p288 = pneg %p107
        %p289 = pneg %p104
        %p290 = pneg %p128
        %p291 = pneg %p125
        %p292 = pneg %p156
        %p293 = pneg %p153
        %s294 = sand.u32 %s143, 1
        %s295 = scalar_lea.sflag [#allocation5], %s294
        %s296 = sand.u32 %s143, 1
        %s297 = smul.addr %s296, 16
        %s298 = scalar_lea.vmem [#allocation11], %s297
        %p300 = scmp.eq.s32.totalorder %s30, 0
        // Predicated region
        $region53: #{cross_attention.2} parent=35 // pred_check
          %p301 = pneg %p300
        $region54: #{cross_attention.2} parent=35 // pred_check_branch
          %303 = sbr.rel (%p301) target = $region56
        $region55: #{cross_attention.2} parent=35 // pred_region
          %v304 = vld [vmem:[%s261] sm:$0xff]
          %v305 = vld [vmem:[%s261 + $0x8] sm:$0xff]
          %v306 = vpack.c.bf16 %v305, %v304
          %v307 = vld [vmem:[#allocation9] sm:$0xf]
          %v308 = vld [vmem:[#allocation9 + $0x4] sm:$0xf]
          %v309 = vld [vmem:[#allocation9 + $0x8] sm:$0xf]
          %v310 = vld [vmem:[#allocation9 + $0xc] sm:$0xf]
          %v311 = vld [vmem:[#allocation9 + $0x10] sm:$0xf]
          %v312 = vld [vmem:[#allocation9 + $0x14] sm:$0xf]
          %v313 = vld [vmem:[#allocation9 + $0x18] sm:$0xf]
          %v314 = vld [vmem:[#allocation9 + $0x1c] sm:$0xf]
          %v323 = vunpack.c.l.b16 %v307
          %v324 = vunpack.c.l.b16 %v308
          %v325 = vunpack.c.l.b16 %v309
          %v326 = vunpack.c.l.b16 %v310
          %v327 = vunpack.c.l.b16 %v311
          %v328 = vunpack.c.l.b16 %v312
          %v329 = vunpack.c.l.b16 %v313
          %v330 = vunpack.c.l.b16 %v314
          %v331 = vpack.c.b16 %v324, %v323
          %v332 = vpack.c.b16 %v326, %v325
          %v333 = vpack.c.b16 %v328, %v327
          %v334 = vpack.c.b16 %v330, %v329
          %vm335 = vcmask 261120
          %v337 = vsel %vm335, %v331, 0
          %v340 = vsel %vm335, %v332, 0
          %v343 = vsel %vm335, %v333, 0
          %v346 = vsel %vm335, %v334, 0
          %v349 = vsel %vm335, %v306, 0
          %351 = vmatprep.subr.bf16.mxu0 0
          %352 = vmatpush1.bf16.xpose.msra.mxu0 %v349
          %353 = vmatprep.subr.bf16.mxu0 0
          %354 = vmatpush1.bf16.xpose.msra.mxu0 0
          %355 = vmatprep.subr.bf16.mxu0 0
          %356 = vmatpush1.bf16.xpose.msra.mxu0 0
          %357 = vmatprep.subr.bf16.mxu0 0
          %358 = vmatpush1.bf16.xpose.msra.mxu0 0
          %359 = vmatprep.subr.bf16.mxu0 0
          %360 = vmatpush1.bf16.xpose.msra.mxu0 0
          %361 = vmatprep.subr.bf16.mxu0 0
          %362 = vmatpush1.bf16.xpose.msra.mxu0 0
          %363 = vmatprep.subr.bf16.mxu0 0
          %364 = vmatpush1.bf16.xpose.msra.mxu0 0
          %365 = vmatprep.subr.bf16.mxu0 0
          %366 = vmatpush1.bf16.xpose.msra.mxu0 0
          %367 = vmatprep.subr.bf16.mxu0 0
          %368 = vmatpush1.bf16.xpose.msra.mxu0 0
          %369 = vmatprep.subr.bf16.mxu0 0
          %370 = vmatpush1.bf16.xpose.msra.mxu0 0
          %371 = vmatprep.subr.bf16.mxu0 0
          %372 = vmatpush1.bf16.xpose.msra.mxu0 0
          %373 = vmatprep.subr.bf16.mxu0 0
          %374 = vmatpush1.bf16.xpose.msra.mxu0 0
          %375 = vmatprep.subr.bf16.mxu0 0
          %376 = vmatpush1.bf16.xpose.msra.mxu0 0
          %377 = vmatprep.subr.bf16.mxu0 0
          %378 = vmatpush1.bf16.xpose.msra.mxu0 0
          %379 = vmatprep.subr.bf16.mxu0 0
          %380 = vmatpush1.bf16.xpose.msra.mxu0 0
          %381 = vmatprep.subr.bf16.mxu0 0
          %382 = vmatpush1.bf16.xpose.msra.mxu0 0
          %383 = vmatprep.mubr.bf16.mxu0 0
          %384 = vmatmul.mubr.bf16.gmra.mrb[0].mxu0 %v337
          %v385 = vpop.f32.mrb[0].mxu0
          %v386 = vadd.f32 0.0, %v385
          %v387 = vpop.f32.mrb[0].mxu0
          %v388 = vpop.f32.mrb[0].mxu0
          %v389 = vadd.f32 0.0, %v388
          %v390 = vpop.f32.mrb[0].mxu0
          %391 = vmatprep.mubr.bf16.mxu0 0
          %392 = vmatmul.mubr.bf16.gmra.mrb[0].mxu0 %v340
          %v393 = vpop.f32.mrb[0].mxu0
          %v394 = vadd.f32 0.0, %v393
          %v395 = vpop.f32.mrb[0].mxu0
          %v396 = vpop.f32.mrb[0].mxu0
          %v397 = vadd.f32 0.0, %v396
          %v398 = vpop.f32.mrb[0].mxu0
          %399 = vmatprep.mubr.bf16.mxu0 0
          %400 = vmatmul.mubr.bf16.gmra.mrb[0].mxu0 %v343
          %v401 = vpop.f32.mrb[0].mxu0
          %v402 = vadd.f32 0.0, %v401
          %v403 = vpop.f32.mrb[0].mxu0
          %v404 = vpop.f32.mrb[0].mxu0
          %v405 = vadd.f32 0.0, %v404
          %v406 = vpop.f32.mrb[0].mxu0
          %407 = vmatprep.mubr.bf16.mxu0 0
          %408 = vmatmul.mubr.bf16.gmra.mrb[0].mxu0 %v346
          %v409 = vpop.f32.mrb[0].mxu0
          %v410 = vadd.f32 0.0, %v409
          %v411 = vpop.f32.mrb[0].mxu0
          %v412 = vpop.f32.mrb[0].mxu0
          %v413 = vadd.f32 0.0, %v412
          %v414 = vpop.f32.mrb[0].mxu0
          %415 = vdwg.mxu0
          %v416 = vpack.c.bf16 %v389, %v386
          %v417 = vpack.c.bf16 %v397, %v394
          %v418 = vpack.c.bf16 %v405, %v402
          %v419 = vpack.c.bf16 %v413, %v410
          %vm420 = vcmask 130048
          %421 = vst.msk [vmem:[#allocation2] sm:$0xff] %vm420, %v416
          %422 = vst.msk [vmem:[#allocation2 + $0x8] sm:$0xff] %vm420, %v417
          %423 = vst.msk [vmem:[#allocation2 + $0x10] sm:$0xff] %vm420, %v418
          %424 = vst.msk [vmem:[#allocation2 + $0x18] sm:$0xff] %vm420, %v419
        $region56: #{cross_attention.2} parent=35 // pred_fallthru
          _
        %v425 = vld [vmem:[#allocation2] sm:$0xff]
        %v426 = vld [vmem:[#allocation2 + $0x8] sm:$0xff]
        %v427 = vld [vmem:[#allocation2 + $0x10] sm:$0xff]
        %v428 = vld [vmem:[#allocation2 + $0x18] sm:$0xff]
        %v429 = vld [vmem:[%s252] sm:$0xff]
        %v430 = vpack.c.bf16 %v429, %v429
        %v431 = vld [vmem:[#allocation8] sm:$0xf]
        %v432 = vld [vmem:[#allocation8 + $0x4] sm:$0xf]
        %v433 = vld [vmem:[#allocation8 + $0x8] sm:$0xf]
        %v434 = vld [vmem:[#allocation8 + $0xc] sm:$0xf]
        %v439 = vunpack.c.l.b16 %v431
        %v440 = vunpack.c.l.b16 %v432
        %v441 = vunpack.c.l.b16 %v433
        %v442 = vunpack.c.l.b16 %v434
        %v443 = vpack.c.b16 %v440, %v439
        %v444 = vpack.c.b16 %v442, %v441
        %vm445 = vcmask 261120
        %v447 = vsel %vm445, %v430, 0
        %v450 = vsel %vm445, %v443, 0
        %v453 = vsel %vm445, %v444, 0
        %455 = vmatprep.subr.bf16.mxu0 0
        %456 = vmatpush1.bf16.xpose.msra.mxu0 %v450
        %457 = vmatprep.subr.bf16.mxu0 0
        %458 = vmatpush1.bf16.xpose.msra.mxu0 %v453
        %459 = vmatprep.subr.bf16.mxu0 0
        %460 = vmatpush1.bf16.xpose.msra.mxu0 0
        %461 = vmatprep.subr.bf16.mxu0 0
        %462 = vmatpush1.bf16.xpose.msra.mxu0 0
        %463 = vmatprep.subr.bf16.mxu0 0
        %464 = vmatpush1.bf16.xpose.msra.mxu0 0
        %465 = vmatprep.subr.bf16.mxu0 0
        %466 = vmatpush1.bf16.xpose.msra.mxu0 0
        %467 = vmatprep.subr.bf16.mxu0 0
        %468 = vmatpush1.bf16.xpose.msra.mxu0 0
        %469 = vmatprep.subr.bf16.mxu0 0
        %470 = vmatpush1.bf16.xpose.msra.mxu0 0
        %471 = vmatprep.subr.bf16.mxu0 0
        %472 = vmatpush1.bf16.xpose.msra.mxu0 0
        %473 = vmatprep.subr.bf16.mxu0 0
        %474 = vmatpush1.bf16.xpose.msra.mxu0 0
        %475 = vmatprep.subr.bf16.mxu0 0
        %476 = vmatpush1.bf16.xpose.msra.mxu0 0
        %477 = vmatprep.subr.bf16.mxu0 0
        %478 = vmatpush1.bf16.xpose.msra.mxu0 0
        %479 = vmatprep.subr.bf16.mxu0 0
        %480 = vmatpush1.bf16.xpose.msra.mxu0 0
        %481 = vmatprep.subr.bf16.mxu0 0
        %482 = vmatpush1.bf16.xpose.msra.mxu0 0
        %483 = vmatprep.subr.bf16.mxu0 0
        %484 = vmatpush1.bf16.xpose.msra.mxu0 0
        %485 = vmatprep.subr.bf16.mxu0 0
        %486 = vmatpush1.bf16.xpose.msra.mxu0 0
        %487 = vmatprep.mubr.bf16.mxu0 0
        %488 = vmatmul.mubr.bf16.gmra.mrb[0].mxu0 %v447
        %v489 = vpop.f32.mrb[0].mxu0
        %v490 = vadd.f32 0.0, %v489
        %v491 = vpop.f32.mrb[0].mxu0
        %v492 = vpop.f32.mrb[0].mxu0
        %v493 = vpop.f32.mrb[0].mxu0
        %494 = vdwg.mxu0
        %v495 = vmul.f32 %v490, 0.5
        %v496 = vpack.c.bf16 %v495, %v495
        %v498 = vsel %vm445, %v496, 0
        %500 = vmatprep.subr.bf16.mxu0 0
        %501 = vmatpush1.bf16.msra.mxu0 %v425
        %502 = vmatprep.subr.bf16.mxu0 0
        %503 = vmatpush1.bf16.msra.mxu0 %v426
        %504 = vmatprep.subr.bf16.mxu0 0
        %505 = vmatpush1.bf16.msra.mxu0 0
        %506 = vmatprep.subr.bf16.mxu0 0
        %507 = vmatpush1.bf16.msra.mxu0 0
        %508 = vmatprep.subr.bf16.mxu0 0
        %509 = vmatpush1.bf16.msra.mxu0 0
        %510 = vmatprep.subr.bf16.mxu0 0
        %511 = vmatpush1.bf16.msra.mxu0 0
        %512 = vmatprep.subr.bf16.mxu0 0
        %513 = vmatpush1.bf16.msra.mxu0 0
        %514 = vmatprep.subr.bf16.mxu0 0
        %515 = vmatpush1.bf16.msra.mxu0 0
        %516 = vmatprep.subr.bf16.mxu0 0
        %517 = vmatpush1.bf16.msra.mxu0 0
        %518 = vmatprep.subr.bf16.mxu0 0
        %519 = vmatpush1.bf16.msra.mxu0 0
        %520 = vmatprep.subr.bf16.mxu0 0
        %521 = vmatpush1.bf16.msra.mxu0 0
        %522 = vmatprep.subr.bf16.mxu0 0
        %523 = vmatpush1.bf16.msra.mxu0 0
        %524 = vmatprep.subr.bf16.mxu0 0
        %525 = vmatpush1.bf16.msra.mxu0 0
        %526 = vmatprep.subr.bf16.mxu0 0
        %527 = vmatpush1.bf16.msra.mxu0 0
        %528 = vmatprep.subr.bf16.mxu0 0
        %529 = vmatpush1.bf16.msra.mxu0 0
        %530 = vmatprep.subr.bf16.mxu0 0
        %531 = vmatpush1.bf16.msra.mxu0 0
        %532 = vmatprep.mubr.bf16.mxu0 0
        %533 = vmatmul.mubr.bf16.gmra.mrb[0].mxu0 %v498
        %v534 = vpop.f32.mrb[0].mxu0
        %v535 = vadd.f32 0.0, %v534
        %v536 = vpop.f32.mrb[0].mxu0
        %v537 = vpop.f32.mrb[0].mxu0
        %v538 = vpop.f32.mrb[0].mxu0
        %539 = vdwg.mxu0
        %vm540 = vcmask 130048
        %v541 = vsel %vm540, %v535, -inf
        %542 = vmax.xlane.f32.xlu0 %v541
        %v543 = vpop.xlane.xlu0 %542
        %v544 = vsub.f32 %v535, %v543
        %v545 = vmul.f32 %v544, 1.442695
        %v546 = vpow.pop %v545
        %v548 = vsel %vm540, 1.0, 0
        %v551 = vsel %vm540, %v546, 0
        %553 = vmatprep.subr.mxu0 0.0
        %554 = vmatpush1.xpose.msra.mxu0 %v551
        %555 = vmatprep.subr.mxu0 0.0
        %556 = vmatpush1.xpose.msra.mxu0 0.0
        %557 = vmatprep.subr.mxu0 0.0
        %558 = vmatpush1.xpose.msra.mxu0 0.0
        %559 = vmatprep.subr.mxu0 0.0
        %560 = vmatpush1.xpose.msra.mxu0 0.0
        %561 = vmatprep.subr.mxu0 0.0
        %562 = vmatpush1.xpose.msra.mxu0 0.0
        %563 = vmatprep.subr.mxu0 0.0
        %564 = vmatpush1.xpose.msra.mxu0 0.0
        %565 = vmatprep.subr.mxu0 0.0
        %566 = vmatpush1.xpose.msra.mxu0 0.0
        %567 = vmatprep.subr.mxu0 0.0
        %568 = vmatpush1.xpose.msra.mxu0 0.0
        %569 = vmatprep.subr.mxu0 0.0
        %570 = vmatpush1.xpose.msra.mxu0 0.0
        %571 = vmatprep.subr.mxu0 0.0
        %572 = vmatpush1.xpose.msra.mxu0 0.0
        %573 = vmatprep.subr.mxu0 0.0
        %574 = vmatpush1.xpose.msra.mxu0 0.0
        %575 = vmatprep.subr.mxu0 0.0
        %576 = vmatpush1.xpose.msra.mxu0 0.0
        %577 = vmatprep.subr.mxu0 0.0
        %578 = vmatpush1.xpose.msra.mxu0 0.0
        %579 = vmatprep.subr.mxu0 0.0
        %580 = vmatpush1.xpose.msra.mxu0 0.0
        %581 = vmatprep.subr.mxu0 0.0
        %582 = vmatpush1.xpose.msra.mxu0 0.0
        %583 = vmatprep.subr.mxu0 0.0
        %584 = vmatpush1.xpose.msra.mxu0 0.0
        %585 = vmatprep.subr.mxu0 0.0
        %586 = vmatpush1.xpose.msra.mxu0 0.0
        %587 = vmatprep.subr.mxu0 0.0
        %588 = vmatpush1.xpose.msra.mxu0 0.0
        %589 = vmatprep.subr.mxu0 0.0
        %590 = vmatpush1.xpose.msra.mxu0 0.0
        %591 = vmatprep.subr.mxu0 0.0
        %592 = vmatpush1.xpose.msra.mxu0 0.0
        %593 = vmatprep.subr.mxu0 0.0
        %594 = vmatpush1.xpose.msra.mxu0 0.0
        %595 = vmatprep.subr.mxu0 0.0
        %596 = vmatpush1.xpose.msra.mxu0 0.0
        %597 = vmatprep.subr.mxu0 0.0
        %598 = vmatpush1.xpose.msra.mxu0 0.0
        %599 = vmatprep.subr.mxu0 0.0
        %600 = vmatpush1.xpose.msra.mxu0 0.0
        %601 = vmatprep.subr.mxu0 0.0
        %602 = vmatpush1.xpose.msra.mxu0 0.0
        %603 = vmatprep.subr.mxu0 0.0
        %604 = vmatpush1.xpose.msra.mxu0 0.0
        %605 = vmatprep.subr.mxu0 0.0
        %606 = vmatpush1.xpose.msra.mxu0 0.0
        %607 = vmatprep.subr.mxu0 0.0
        %608 = vmatpush1.xpose.msra.mxu0 0.0
        %609 = vmatprep.subr.mxu0 0.0
        %610 = vmatpush1.xpose.msra.mxu0 0.0
        %611 = vmatprep.subr.mxu0 0.0
        %612 = vmatpush1.xpose.msra.mxu0 0.0
        %613 = vmatprep.subr.mxu0 0.0
        %614 = vmatpush1.xpose.msra.mxu0 0.0
        %615 = vmatprep.subr.mxu0 0.0
        %616 = vmatpush1.xpose.msra.mxu0 0.0
        %617 = vmatprep.mubr.f32.mxu0 0.0
        %618 = vmatmul.mubr.f32.gmra.mrb[0].mxu0 %v548
        %v619 = vpop.f32.mrb[0].mxu0
        %v620 = vadd.f32 0.0, %v619
        %v621 = vpop.f32.mrb[0].mxu0
        %622 = vdwg.mxu0
        %v623 = vrcp.pop %v620
        %v624 = vmul.f32 %v620, %v623
        %v625 = vsub.f32 2.0, %v624
        %v626 = vmul.f32 %v623, %v625
        %v627 = vpack.c.bf16 %v546, %v546
        %v629 = vsel %vm540, %v427, 0
        %v632 = vsel %vm540, %v428, 0
        %v635 = vsel %vm540, %v627, 0
        %637 = vmatprep.subr.bf16.mxu0 0
        %638 = vmatpush1.bf16.xpose.msra.mxu0 %v635
        %639 = vmatprep.subr.bf16.mxu0 0
        %640 = vmatpush1.bf16.xpose.msra.mxu0 0
        %641 = vmatprep.subr.bf16.mxu0 0
        %642 = vmatpush1.bf16.xpose.msra.mxu0 0
        %643 = vmatprep.subr.bf16.mxu0 0
        %644 = vmatpush1.bf16.xpose.msra.mxu0 0
        %645 = vmatprep.subr.bf16.mxu0 0
        %646 = vmatpush1.bf16.xpose.msra.mxu0 0
        %647 = vmatprep.subr.bf16.mxu0 0
        %648 = vmatpush1.bf16.xpose.msra.mxu0 0
        %649 = vmatprep.subr.bf16.mxu0 0
        %650 = vmatpush1.bf16.xpose.msra.mxu0 0
        %651 = vmatprep.subr.bf16.mxu0 0
        %652 = vmatpush1.bf16.xpose.msra.mxu0 0
        %653 = vmatprep.subr.bf16.mxu0 0
        %654 = vmatpush1.bf16.xpose.msra.mxu0 0
        %655 = vmatprep.subr.bf16.mxu0 0
        %656 = vmatpush1.bf16.xpose.msra.mxu0 0
        %657 = vmatprep.subr.bf16.mxu0 0
        %658 = vmatpush1.bf16.xpose.msra.mxu0 0
        %659 = vmatprep.subr.bf16.mxu0 0
        %660 = vmatpush1.bf16.xpose.msra.mxu0 0
        %661 = vmatprep.subr.bf16.mxu0 0
        %662 = vmatpush1.bf16.xpose.msra.mxu0 0
        %663 = vmatprep.subr.bf16.mxu0 0
        %664 = vmatpush1.bf16.xpose.msra.mxu0 0
        %665 = vmatprep.subr.bf16.mxu0 0
        %666 = vmatpush1.bf16.xpose.msra.mxu0 0
        %667 = vmatprep.subr.bf16.mxu0 0
        %668 = vmatpush1.bf16.xpose.msra.mxu0 0
        %669 = vmatprep.mubr.bf16.mxu0 0
        %670 = vmatmul.mubr.bf16.gmra.mrb[0].mxu0 %v629
        %v671 = vpop.f32.mrb[0].mxu0
        %v672 = vadd.f32 0.0, %v671
        %v673 = vpop.f32.mrb[0].mxu0
        %v674 = vpop.f32.mrb[0].mxu0
        %v675 = vadd.f32 0.0, %v674
        %v676 = vpop.f32.mrb[0].mxu0
        %677 = vmatprep.mubr.bf16.mxu0 0
        %678 = vmatmul.mubr.bf16.gmra.mrb[0].mxu0 %v632
        %v679 = vpop.f32.mrb[0].mxu0
        %v680 = vadd.f32 0.0, %v679
        %v681 = vpop.f32.mrb[0].mxu0
        %v682 = vpop.f32.mrb[0].mxu0
        %v683 = vadd.f32 0.0, %v682
        %v684 = vpop.f32.mrb[0].mxu0
        %685 = vdwg.mxu0
        %v686 = vlaneseq
        %v687 = vshrl.u32 %v686, 7
        %v688 = vsub.s32 0, %v687
        %v689 = vrot.slane %v626, %v688
        %v690 = vmul.f32 %v672, %v689
        %v691 = vmul.f32 %v675, %v689
        %v692 = vmul.f32 %v680, %v689
        %v693 = vmul.f32 %v683, %v689
        %v694 = vpack.c.bf16 %v691, %v690
        %v695 = vpack.c.bf16 %v693, %v692
        %v698 = vunpack.c.l.b16 %v694
        %v699 = vunpack.c.h.b16 %v694
        %v700 = vunpack.c.l.b16 %v695
        %v701 = vunpack.c.h.b16 %v695
        %v702 = vpack.c.b16 %v698, %v698
        %v703 = vpack.c.b16 %v699, %v699
        %v704 = vpack.c.b16 %v700, %v700
        %v705 = vpack.c.b16 %v701, %v701
        %vm710 = vcmask 60416
        %711 = vst.msk [vmem:[%s298] sm:$0xf] %vm710, %v702
        %712 = vst.msk [vmem:[%s298 + $0x4] sm:$0xf] %vm710, %v703
        %713 = vst.msk [vmem:[%s298 + $0x8] sm:$0xf] %vm710, %v704
        %714 = vst.msk [vmem:[%s298 + $0xc] sm:$0xf] %vm710, %v705
        %s715 = sand.u32 %s143, 1
        %s716 = scalar_lea.sflag [#allocation5], %s715
        %s717 = sand.u32 %s143, 1
        %s718 = smul.addr %s717, 16
        %s719 = scalar_lea.vmem [#allocation11], %s718
        // Predicated region
        $region57: #{cross_attention.2} parent=35 // pred_check
          %p720 = pneg %p153
        $region58: #{cross_attention.2} parent=35 // pred_check_branch
          %722 = sbr.rel (%p720) target = $region60
        $region59: #{cross_attention.2} parent=35 // pred_region
          %s724 = ssub.s32 256, 256
          %725 = vsyncadd %s716, %s724
          %s726 = smul.addr %s29, 4
          %s727 = sadd.s32 %s30, %s726
          %s728 = smul.addr %s727, 64
          %s729 = scalar_lea.hbm %s4, %s728
          %s730 = sshll.u32 %s719, 4
          %s731 = int_to_ptr.vmem [resolvable:$true] %s730
          %736 = dma.vmem_to_hbm [thread:$0]  %s731, 256, %s729, %s716, 64, 64, 4
        $region60: #{cross_attention.2} parent=35 // pred_fallthru
          _
      $region36: #{cross_attention.2} parent=5 // pred_fallthru
        _
      %p737 = scmp.le.s32.totalorder 2, %s20
      // Predicated region
      $region61: #{cross_attention.2} parent=5 // pred_check
        %p738 = pneg %p737
      $region62: #{cross_attention.2} parent=5 // pred_check_branch
        %740 = sbr.rel (%p738) target = $region64
      $region63: #{cross_attention.2} parent=5 // pred_region
        %s741 = ssub.s32 %s20, 2
        // Predicated region
        $region65: #{cross_attention.2} parent=63 // pred_check
          %p742 = pneg %p159
        $region66: #{cross_attention.2} parent=63 // pred_check_branch
          %744 = sbr.rel (%p742) target = $region68
        $region67: #{cross_attention.2} parent=63 // pred_region
          %s745 = sand.u32 %s144, 1
          %s746 = scalar_lea.sflag [#allocation5], %s745
          %s747 = sand.u32 %s144, 1
          %s748 = smul.addr %s747, 16
          %s749 = scalar_lea.vmem [#allocation11], %s748
          %750 = dma.done %s746, 256
        $region68: #{cross_attention.2} parent=63 // pred_fallthru
          _
      $region64: #{cross_attention.2} parent=5 // pred_fallthru
        _
    $region6: #{cross_attention.2} parent=1 // loop_footer
      %s24 = sadd.s32 1, %s20
    $region7: #{cross_attention.2} parent=1 // loop_footer_branch
      %19 = sbr.rel target = $region3
    $region8: #{cross_attention.2} parent=1 // loop_exit
      _
    %751 = vsyncpa [#allocation4], 1
    %s752 = scalar_lea.sflag [#allocation4], 1
    %753 = vsyncpa %s752, 1
    %754 = vsyncpa [#allocation7], 1
    %s755 = scalar_lea.sflag [#allocation7], 1
    %756 = vsyncpa %s755, 1
    %757 = vsyncpa [#allocation10], 1
    %758 = vsyncpa [#allocation5], 1
    %s759 = scalar_lea.sflag [#allocation5], 1
    %760 = vsyncpa %s759, 1

// kernel: cross_attention.3
$region0: #{cross_attention.3}
  #allocation0 [shape = 'u32[]', space=smem, size = 0x4, offset = 0x4, fixed_abs, tag = 'smem constant byte address 0x4 - core index']
  #allocation1 [shape = 'u32[144,128]{1,0:T(1,128)}', space=vmem, size = 0x12000, scoped, tag = 'internal scratch']
  %s0 = inlined_call_operand.hbm [shape: bf16[16,32], index: 0, kind: input, shape index: {}]
  %s1 = inlined_call_operand.hbm [shape: bf16[32,32], index: 1, kind: input, shape index: {}]
  %s2 = inlined_call_operand.hbm [shape: f32[1,32], index: 2, kind: input, shape index: {}]
  %s3 = inlined_call_operand.hbm [shape: f32[16,32], index: 3, kind: output, shape index: {}]
  %s4 = sld [smem:[#allocation0]]
  $region57: #{cross_attention.3} parent=0
    _
  %s6 = ssub.s32 1, %s4
  %s7 = scalar_select 0, %s6, %s4
  $region1: #{cross_attention.3} parent=0
    #allocation2 [shape = 'u8[4096]{0}', space=vmem, size = 0x1000, scoped, tag = 'input window, operand 0']
    #allocation3 [shape = 's32[2]{0}', space=sflag, size = 0x8, scoped, tag = 'scoped memory for cross_attention.3']
    #allocation4 [shape = 's32[2]{0}', space=sflag, size = 0x8, scoped, tag = 'scoped memory for cross_attention.3']
    #allocation5 [shape = 'u8[8192]{0}', space=vmem, size = 0x2000, scoped, tag = 'input window, operand 1, single buffered']
    #allocation6 [shape = 's32[1]{0}', space=sflag, size = 0x4, scoped, tag = 'scoped memory for cross_attention.3']
    #allocation7 [shape = 'u8[512]{0}', space=vmem, size = 0x400, scoped, tag = 'input window, operand 2, single buffered']
    #allocation8 [shape = 'u8[8192]{0}', space=vmem, size = 0x2000, scoped, tag = 'output window, operand 0']
    %8 = vsyncpa [#allocation3], 0
    %s9 = scalar_lea.sflag [#allocation3], 1
    %10 = vsyncpa %s9, 0
    %11 = vsyncpa [#allocation6], 0
    %12 = vsyncpa [#allocation4], 0
    %s13 = scalar_lea.sflag [#allocation4], 1
    %14 = vsyncpa %s13, 0
    loop: start=0, step=1, limit=4
    $region2: #{cross_attention.3} parent=1 // loop_pre_header
      _
    $region3: #{cross_attention.3} parent=1 // loop_header
      %s16 = sphi 0, %s20
      %p17 = scmp.ge.s32.totalorder %s16, 4
      %s26 = sphi 0, %s28
      %s29 = sphi 0, %s26
      %s30 = sphi 0, %s29
      %s46 = sphi 0, %s30
      %s50 = sphi 0, %s50
      %s52 = sphi 0, %s50
      %s53 = sphi 0, %s52
      %s67 = sphi 0, %s53
      %s71 = sphi 0, %s71
      %s73 = sphi 0, %s71
      %s74 = sphi 0, %s73
      %s88 = sphi 0, %s74
      %s94 = sphi 0, %s96
      %s97 = sphi 0, %s94
      %s98 = sphi 0, %s97
      %s114 = sphi 0, %s98
    $region4: #{cross_attention.3} parent=1 // loop_header_branch
      %19 = sbr.rel (%p17) target = $region8
    $region5: #{cross_attention.3} parent=1 // loop_body
      %s21 = ssub.s32 %s16, 1
      %s22 = ssub.s32 %s16, 2
      %s23 = sadd.s32 %s16, 1
      %s24 = ssub.s32 %s16, %s23
      %p25 = scmp.eq.s32.totalorder %s24, 0
      %s27 = sadd.s32 %s26, 1
      %s28 = scalar_select %p25, %s26, %s27
      %p31 = pneg %p25
      %p32 = scmp.eq.s32.totalorder %s16, 1
      %p33 = por %p31, %p32
      %p34 = scmp.ne.s32.totalorder %s26, %s29
      %p35 = scmp.eq.s32.totalorder %s16, 0
      %p36 = por %p34, %p35
      %p37 = scmp.ne.s32.totalorder %s26, %s29
      %p38 = scmp.eq.s32.totalorder %s21, 1
      %p39 = por %p37, %p38
      %p40 = scmp.ne.s32.totalorder %s29, %s30
      %p41 = scmp.eq.s32.totalorder %s21, 0
      %p42 = por %p40, %p41
      %p43 = scmp.ne.s32.totalorder %s29, %s30
      %p44 = scmp.eq.s32.totalorder %s22, 1
      %p45 = por %p43, %p44
      %p47 = scmp.ne.s32.totalorder %s30, %s46
      %p48 = scmp.eq.s32.totalorder %s22, 0
      %p49 = por %p47, %p48
      %s51 = sadd.s32 %s50, 1
      %p54 = scmp.eq.s32.totalorder %s16, 1
      %p55 = scmp.ne.s32.totalorder %s50, %s52
      %p56 = scmp.eq.s32.totalorder %s16, 0
      %p57 = por %p55, %p56
      %p58 = scmp.ne.s32.totalorder %s50, %s52
      %p59 = scmp.eq.s32.totalorder %s21, 1
      %p60 = por %p58, %p59
      %p61 = scmp.ne.s32.totalorder %s52, %s53
      %p62 = scmp.eq.s32.totalorder %s21, 0
      %p63 = por %p61, %p62
      %p64 = scmp.ne.s32.totalorder %s52, %s53
      %p65 = scmp.eq.s32.totalorder %s22, 1
      %p66 = por %p64, %p65
      %p68 = scmp.ne.s32.totalorder %s53, %s67
      %p69 = scmp.eq.s32.totalorder %s22, 0
      %p70 = por %p68, %p69
      %s72 = sadd.s32 %s71, 1
      %p75 = scmp.eq.s32.totalorder %s16, 1
      %p76 = scmp.ne.s32.totalorder %s71, %s73
      %p77 = scmp.eq.s32.totalorder %s16, 0
      %p78 = por %p76, %p77
      %p79 = scmp.ne.s32.totalorder %s71, %s73
      %p80 = scmp.eq.s32.totalorder %s21, 1
      %p81 = por %p79, %p80
      %p82 = scmp.ne.s32.totalorder %s73, %s74
      %p83 = scmp.eq.s32.totalorder %s21, 0
      %p84 = por %p82, %p83
      %p85 = scmp.ne.s32.totalorder %s73, %s74
      %p86 = scmp.eq.s32.totalorder %s22, 1
      %p87 = por %p85, %p86
      %p89 = scmp.ne.s32.totalorder %s74, %s88
      %p90 = scmp.eq.s32.totalorder %s22, 0
      %p91 = por %p89, %p90
      %s92 = ssub.s32 %s16, %s23
      %p93 = scmp.eq.s32.totalorder %s92, 0
      %s95 = sadd.s32 %s94, 1
      %s96 = scalar_select %p93, %s94, %s95
      %p99 = pneg %p93
      %p100 = scmp.eq.s32.totalorder %s16, 1
      %p101 = por %p99, %p100
      %p102 = scmp.ne.s32.totalorder %s94, %s97
      %p103 = scmp.eq.s32.totalorder %s16, 0
      %p104 = por %p102, %p103
      %p105 = scmp.ne.s32.totalorder %s94, %s97
      %p106 = scmp.eq.s32.totalorder %s21, 1
      %p107 = por %p105, %p106
      %p108 = scmp.ne.s32.totalorder %s97, %s98
      %p109 = scmp.eq.s32.totalorder %s21, 0
      %p110 = por %p108, %p109
      %p111 = scmp.ne.s32.totalorder %s97, %s98
      %p112 = scmp.eq.s32.totalorder %s22, 1
      %p113 = por %p111, %p112
      %p115 = scmp.ne.s32.totalorder %s98, %s114
      %p116 = scmp.eq.s32.totalorder %s22, 0
      %p117 = por %p115, %p116
      %p118 = scmp.le.s32.totalorder 1, %s16
      %p119 = scmp.lt.s32.totalorder %s16, 3
      %p120 = pnand %p118, %p119
      %p121 = pneg %p120
      // Predicated region
      $region9: #{cross_attention.3} parent=5 // pred_check
        _
      $region10: #{cross_attention.3} parent=5 // pred_check_branch
        %123 = sbr.rel (%p120) target = $region12
      $region11: #{cross_attention.3} parent=5 // pred_region
        %s124 = ssub.s32 %s16, 1
        // Predicated region
        $region13: #{cross_attention.3} parent=11 // pred_check
          %p125 = pneg %p63
        $region14: #{cross_attention.3} parent=11 // pred_check_branch
          %127 = sbr.rel (%p125) target = $region16
        $region15: #{cross_attention.3} parent=11 // pred_region
          %s129 = ssub.s32 256, 256
          %130 = vsyncadd [#allocation6], %s129
          %s131 = sshll.u32 [#allocation5], 4
          %s132 = int_to_ptr.vmem [resolvable:$true] %s131
          %137 = dma.hbm_to_vmem [thread:$0]  %s1, 256, %s132, [#allocation6], 64, 64, 4
        $region16: #{cross_attention.3} parent=11 // pred_fallthru
          _
        // Predicated region
        $region17: #{cross_attention.3} parent=11 // pred_check
          %p138 = pneg %p84
        $region18: #{cross_attention.3} parent=11 // pred_check_branch
          %140 = sbr.rel (%p138) target = $region20
        $region19: #{cross_attention.3} parent=11 // pred_region
          %s142 = ssub.s32 16, 16
          %143 = vsyncadd [#allocation6], %s142
          %s145 = sshll.u32 [#allocation7], 4
          %s146 = int_to_ptr.vmem [resolvable:$true] %s145
          %148 = dma.hbm_to_vmem [thread:$0]  %s2, 16, %s146, [#allocation6]
        $region20: #{cross_attention.3} parent=11 // pred_fallthru
          _
      $region12: #{cross_attention.3} parent=5 // pred_fallthru
        _
      %p149 = scmp.lt.s32.totalorder %s16, 2
      // Predicated region
      $region21: #{cross_attention.3} parent=5 // pred_check
        %p150 = pneg %p149
      $region22: #{cross_attention.3} parent=5 // pred_check_branch
        %152 = sbr.rel (%p150) target = $region24
      $region23: #{cross_attention.3} parent=5 // pred_region
        // Predicated region
        $region25: #{cross_attention.3} parent=23 // pred_check
          %p153 = pneg %p36
        $region26: #{cross_attention.3} parent=23 // pred_check_branch
          %155 = sbr.rel (%p153) target = $region28
        $region27: #{cross_attention.3} parent=23 // pred_region
          %s156 = sand.u32 %s26, 1
          %s157 = scalar_lea.sflag [#allocation3], %s156
          %s158 = sand.u32 %s26, 1
          %s159 = smul.addr %s158, 4
          %s160 = scalar_lea.vmem [#allocation2], %s159
          %s162 = ssub.s32 64, 64
          %163 = vsyncadd %s157, %s162
          %s164 = smul.addr %s16, 64
          %s165 = scalar_lea.hbm %s0, %s164
          %s167 = sshll.u32 %s160, 4
          %s168 = int_to_ptr.vmem [resolvable:$true] %s167
          %170 = dma.hbm_to_vmem [thread:$0]  %s165, 64, %s168, %s157
        $region28: #{cross_attention.3} parent=23 // pred_fallthru
          _
      $region24: #{cross_attention.3} parent=5 // pred_fallthru
        _
      %p171 = scmp.le.s32.totalorder 1, %s16
      %p172 = scmp.lt.s32.totalorder %s16, 3
      %p173 = pnand %p171, %p172
      %p174 = pneg %p173
      // Predicated region
      $region29: #{cross_attention.3} parent=5 // pred_check
        _
      $region30: #{cross_attention.3} parent=5 // pred_check_branch
        %176 = sbr.rel (%p173) target = $region32
      $region31: #{cross_attention.3} parent=5 // pred_region
        %s177 = ssub.s32 %s16, 1
        %s178 = sand.u32 %s29, 1
        %s179 = scalar_lea.sflag [#allocation3], %s178
        %s180 = sand.u32 %s29, 1
        %s181 = smul.addr %s180, 4
        %s182 = scalar_lea.vmem [#allocation2], %s181
        // Predicated region
        $region33: #{cross_attention.3} parent=31 // pred_check
          %p183 = pneg %p42
        $region34: #{cross_attention.3} parent=31 // pred_check_branch
          %185 = sbr.rel (%p183) target = $region36
        $region35: #{cross_attention.3} parent=31 // pred_region
          %186 = dma.done %s179, 64
        $region36: #{cross_attention.3} parent=31 // pred_fallthru
          _
        // Predicated region
        $region37: #{cross_attention.3} parent=31 // pred_check
          %p187 = pneg %p63
        $region38: #{cross_attention.3} parent=31 // pred_check_branch
          %189 = sbr.rel (%p187) target = $region40
        $region39: #{cross_attention.3} parent=31 // pred_region
          %190 = dma.done [#allocation6], 256
        $region40: #{cross_attention.3} parent=31 // pred_fallthru
          _
        // Predicated region
        $region41: #{cross_attention.3} parent=31 // pred_check
          %p191 = pneg %p84
        $region42: #{cross_attention.3} parent=31 // pred_check_branch
          %193 = sbr.rel (%p191) target = $region44
        $region43: #{cross_attention.3} parent=31 // pred_region
          %194 = dma.done [#allocation6], 16
        $region44: #{cross_attention.3} parent=31 // pred_fallthru
          _
        %s195 = sand.u32 %s29, 1
        %s196 = scalar_lea.sflag [#allocation3], %s195
        %s197 = sand.u32 %s29, 1
        %s198 = smul.addr %s197, 4
        %s199 = scalar_lea.vmem [#allocation2], %s198
        %p200 = pneg %p42
        %p201 = pneg %p39
        %p202 = pneg %p63
        %p203 = pneg %p60
        %p204 = pneg %p84
        %p205 = pneg %p81
        %p206 = pneg %p110
        %p207 = pneg %p107
        %s208 = sand.u32 %s97, 1
        %s209 = scalar_lea.sflag [#allocation4], %s208
        %s210 = sand.u32 %s97, 1
        %s211 = smul.addr %s210, 8
        %s212 = scalar_lea.vmem [#allocation8], %s211
        %v214 = vld [vmem:[%s182] sm:$0xf]
        %v215 = vld [vmem:[#allocation5] sm:$0xf]
        %v216 = vld [vmem:[#allocation5 + $0x4] sm:$0xf]
        %v217 = vld [vmem:[#allocation5 + $0x8] sm:$0xf]
        %v218 = vld [vmem:[#allocation5 + $0xc] sm:$0xf]
        %v219 = vld [vmem:[#allocation7] sm:$0x1]
        %v221 = vlaneseq
        %v222 = vshrl.u32 %v221, 7
        %v223 = vsub.s32 0, %v222
        %v224 = vrot.slane %v219, %v223
        %v230 = vunpack.c.l.b16 %v215
        %v231 = vunpack.c.l.b16 %v216
        %v232 = vunpack.c.l.b16 %v217
        %v233 = vunpack.c.l.b16 %v218
        %v234 = vpack.c.b16 %v231, %v230
        %v235 = vpack.c.b16 %v233, %v232
        %vm236 = vcmask 261120
        %v238 = vsel %vm236, %v214, 0
        %v241 = vsel %vm236, %v234, 0
        %v244 = vsel %vm236, %v235, 0
        %246 = vmatprep.subr.bf16.mxu0 0
        %247 = vmatpush1.bf16.xpose.msra.mxu0 %v241
        %248 = vmatprep.subr.bf16.mxu0 0
        %249 = vmatpush1.bf16.xpose.msra.mxu0 %v244
        %250 = vmatprep.subr.bf16.mxu0 0
        %251 = vmatpush1.bf16.xpose.msra.mxu0 0
        %252 = vmatprep.subr.bf16.mxu0 0
        %253 = vmatpush1.bf16.xpose.msra.mxu0 0
        %254 = vmatprep.subr.bf16.mxu0 0
        %255 = vmatpush1.bf16.xpose.msra.mxu0 0
        %256 = vmatprep.subr.bf16.mxu0 0
        %257 = vmatpush1.bf16.xpose.msra.mxu0 0
        %258 = vmatprep.subr.bf16.mxu0 0
        %259 = vmatpush1.bf16.xpose.msra.mxu0 0
        %260 = vmatprep.subr.bf16.mxu0 0
        %261 = vmatpush1.bf16.xpose.msra.mxu0 0
        %262 = vmatprep.subr.bf16.mxu0 0
        %263 = vmatpush1.bf16.xpose.msra.mxu0 0
        %264 = vmatprep.subr.bf16.mxu0 0
        %265 = vmatpush1.bf16.xpose.msra.mxu0 0
        %266 = vmatprep.subr.bf16.mxu0 0
        %267 = vmatpush1.bf16.xpose.msra.mxu0 0
        %268 = vmatprep.subr.bf16.mxu0 0
        %269 = vmatpush1.bf16.xpose.msra.mxu0 0
        %270 = vmatprep.subr.bf16.mxu0 0
        %271 = vmatpush1.bf16.xpose.msra.mxu0 0
        %272 = vmatprep.subr.bf16.mxu0 0
        %273 = vmatpush1.bf16.xpose.msra.mxu0 0
        %274 = vmatprep.subr.bf16.mxu0 0
        %275 = vmatpush1.bf16.xpose.msra.mxu0 0
        %276 = vmatprep.subr.bf16.mxu0 0
        %277 = vmatpush1.bf16.xpose.msra.mxu0 0
        %278 = vmatprep.mubr.bf16.mxu0 0
        %279 = vmatmul.mubr.bf16.gmra.mrb[0].mxu0 %v238
        %v280 = vpop.f32.mrb[0].mxu0
        %v281 = vadd.f32 %v224, %v280
        %v282 = vpop.f32.mrb[0].mxu0
        %v283 = vpop.f32.mrb[0].mxu0
        %v284 = vpop.f32.mrb[0].mxu0
        %285 = vdwg.mxu0
        %286 = vst.msk [vmem:[%s212] sm:$0xff] %vm236, %v281
        %s287 = sand.u32 %s97, 1
        %s288 = scalar_lea.sflag [#allocation4], %s287
        %s289 = sand.u32 %s97, 1
        %s290 = smul.addr %s289, 8
        %s291 = scalar_lea.vmem [#allocation8], %s290
        // Predicated region
        $region45: #{cross_attention.3} parent=31 // pred_check
          %p292 = pneg %p107
        $region46: #{cross_attention.3} parent=31 // pred_check_branch
          %294 = sbr.rel (%p292) target = $region48
        $region47: #{cross_attention.3} parent=31 // pred_region
          %s296 = ssub.s32 128, 128
          %297 = vsyncadd %s288, %s296
          %s298 = smul.addr %s21, 128
          %s299 = scalar_lea.hbm %s3, %s298
          %s301 = sshll.u32 %s291, 4
          %s302 = int_to_ptr.vmem [resolvable:$true] %s301
          %304 = dma.vmem_to_hbm [thread:$0]  %s302, 128, %s299, %s288
        $region48: #{cross_attention.3} parent=31 // pred_fallthru
          _
      $region32: #{cross_attention.3} parent=5 // pred_fallthru
        _
      %p305 = scmp.le.s32.totalorder 2, %s16
      // Predicated region
      $region49: #{cross_attention.3} parent=5 // pred_check
        %p306 = pneg %p305
      $region50: #{cross_attention.3} parent=5 // pred_check_branch
        %308 = sbr.rel (%p306) target = $region52
      $region51: #{cross_attention.3} parent=5 // pred_region
        %s309 = ssub.s32 %s16, 2
        // Predicated region
        $region53: #{cross_attention.3} parent=51 // pred_check
          %p310 = pneg %p113
        $region54: #{cross_attention.3} parent=51 // pred_check_branch
          %312 = sbr.rel (%p310) target = $region56
        $region55: #{cross_attention.3} parent=51 // pred_region
          %s313 = sand.u32 %s98, 1
          %s314 = scalar_lea.sflag [#allocation4], %s313
          %s315 = sand.u32 %s98, 1
          %s316 = smul.addr %s315, 8
          %s317 = scalar_lea.vmem [#allocation8], %s316
          %318 = dma.done %s314, 128
        $region56: #{cross_attention.3} parent=51 // pred_fallthru
          _
      $region52: #{cross_attention.3} parent=5 // pred_fallthru
        _
    $region6: #{cross_attention.3} parent=1 // loop_footer
      %s20 = sadd.s32 1, %s16
    $region7: #{cross_attention.3} parent=1 // loop_footer_branch
      %15 = sbr.rel target = $region3
    $region8: #{cross_attention.3} parent=1 // loop_exit
      _
    %319 = vsyncpa [#allocation3], 1
    %s320 = scalar_lea.sflag [#allocation3], 1
    %321 = vsyncpa %s320, 1
    %322 = vsyncpa [#allocation6], 1
    %323 = vsyncpa [#allocation4], 1
    %s324 = scalar_lea.sflag [#allocation4], 1
    %325 = vsyncpa %s324, 1

// kernel: cross_attention.2
$region0: #{cross_attention.2}
  #allocation0 [shape = 'u32[]', space=smem, size = 0x4, offset = 0x4, fixed_abs, tag = 'smem constant byte address 0x4 - core index']
  #allocation1 [shape = 'u32[144,128]{1,0:T(1,128)}', space=vmem, size = 0x12000, scoped, tag = 'internal scratch']
  #allocation2 [shape = 'bf16[64,16]{1,0:T(16,128)(2,1)}', space=vmem, size = 0x4000, scoped, tag = 'scratch operand']
  %s0 = inlined_call_operand.hbm [shape: f32[2,8,32], index: 0, kind: input, shape index: {}]
  %s1 = inlined_call_operand.hbm [shape: f32[2,16,32], index: 1, kind: input, shape index: {}]
  %s2 = inlined_call_operand.hbm [shape: bf16[32,32], index: 2, kind: input, shape index: {}]
  %s3 = inlined_call_operand.hbm [shape: bf16[64,32], index: 3, kind: input, shape index: {}]
  %s4 = inlined_call_operand.hbm [shape: bf16[2,32,8], index: 4, kind: output, shape index: {}]
  %s5 = sld [smem:[#allocation0]]
  $region69: #{cross_attention.2} parent=0
    _
  %s7 = ssub.s32 1, %s5
  %s8 = scalar_select 0, %s7, %s5
  $region1: #{cross_attention.2} parent=0
    #allocation3 [shape = 'u8[8192]{0}', space=vmem, size = 0x2000, scoped, tag = 'input window, operand 0']
    #allocation4 [shape = 's32[2]{0}', space=sflag, size = 0x8, scoped, tag = 'scoped memory for cross_attention.2']
    #allocation5 [shape = 's32[2]{0}', space=sflag, size = 0x8, scoped, tag = 'scoped memory for cross_attention.2']
    #allocation6 [shape = 'u8[16384]{0}', space=vmem, size = 0x4000, scoped, tag = 'input window, operand 1']
    #allocation7 [shape = 's32[2]{0}', space=sflag, size = 0x8, scoped, tag = 'scoped memory for cross_attention.2']
    #allocation8 [shape = 'u8[8192]{0}', space=vmem, size = 0x2000, scoped, tag = 'input window, operand 2, single buffered']
    #allocation9 [shape = 'u8[16384]{0}', space=vmem, size = 0x4000, scoped, tag = 'input window, operand 3, single buffered']
    #allocation10 [shape = 's32[1]{0}', space=sflag, size = 0x4, scoped, tag = 'scoped memory for cross_attention.2']
    #allocation11 [shape = 'u8[16384]{0}', space=vmem, size = 0x4000, scoped, tag = 'output window, operand 0']
    %9 = vsyncpa [#allocation4], 0
    %s10 = scalar_lea.sflag [#allocation4], 1
    %11 = vsyncpa %s10, 0
    %12 = vsyncpa [#allocation7], 0
    %s13 = scalar_lea.sflag [#allocation7], 1
    %14 = vsyncpa %s13, 0
    %15 = vsyncpa [#allocation10], 0
    %16 = vsyncpa [#allocation5], 0
    %s17 = scalar_lea.sflag [#allocation5], 1
    %18 = vsyncpa %s17, 0
    loop: start=0, step=1, limit=4
    $region2: #{cross_attention.2} parent=1 // loop_pre_header
      _
    $region3: #{cross_attention.2} parent=1 // loop_header
      %s20 = sphi 0, %s24
      %p21 = scmp.ge.s32.totalorder %s20, 4
      %s27 = sphi 0, %s39
      %s28 = sphi 0, %s35
      %s29 = sphi 0, %s27
      %s30 = sphi 0, %s28
      %s31 = sphi 0, %s29
      %s32 = sphi 0, %s30
      %s44 = sphi 0, %s46
      %s47 = sphi 0, %s44
      %s48 = sphi 0, %s47
      %s64 = sphi 0, %s48
      %s70 = sphi 0, %s72
      %s73 = sphi 0, %s70
      %s74 = sphi 0, %s73
      %s90 = sphi 0, %s74
      %s94 = sphi 0, %s94
      %s96 = sphi 0, %s94
      %s97 = sphi 0, %s96
      %s111 = sphi 0, %s97
      %s115 = sphi 0, %s115
      %s117 = sphi 0, %s115
      %s118 = sphi 0, %s117
      %s132 = sphi 0, %s118
      %s140 = sphi 0, %s142
      %s143 = sphi 0, %s140
      %s144 = sphi 0, %s143
      %s160 = sphi 0, %s144
    $region4: #{cross_attention.2} parent=1 // loop_header_branch
      %23 = sbr.rel (%p21) target = $region8
    $region5: #{cross_attention.2} parent=1 // loop_body
      %s25 = ssub.s32 %s20, 1
      %s26 = ssub.s32 %s20, 2
      %s33 = sadd.s32 1, %s28
      %p34 = scmp.ge.s32.totalorder %s33, 1
      %s35 = scalar_select %p34, 0, %s33
      %s36 = sadd.s32 1, %s27
      %s37 = scalar_select %p34, %s36, %s27
      %p38 = scmp.ge.s32.totalorder %s37, 2
      %s39 = scalar_select %p38, 0, %s37
      %s40 = ssub.s32 %s27, %s39
      %s41 = ssub.s32 %s28, %s35
      %s42 = sor.u32 %s40, %s41
      %p43 = scmp.eq.s32.totalorder %s42, 0
      %s45 = sadd.s32 %s44, 1
      %s46 = scalar_select %p43, %s44, %s45
      %p49 = pneg %p43
      %p50 = scmp.eq.s32.totalorder %s20, 1
      %p51 = por %p49, %p50
      %p52 = scmp.ne.s32.totalorder %s44, %s47
      %p53 = scmp.eq.s32.totalorder %s20, 0
      %p54 = por %p52, %p53
      %p55 = scmp.ne.s32.totalorder %s44, %s47
      %p56 = scmp.eq.s32.totalorder %s25, 1
      %p57 = por %p55, %p56
      %p58 = scmp.ne.s32.totalorder %s47, %s48
      %p59 = scmp.eq.s32.totalorder %s25, 0
      %p60 = por %p58, %p59
      %p61 = scmp.ne.s32.totalorder %s47, %s48
      %p62 = scmp.eq.s32.totalorder %s26, 1
      %p63 = por %p61, %p62
      %p65 = scmp.ne.s32.totalorder %s48, %s64
      %p66 = scmp.eq.s32.totalorder %s26, 0
      %p67 = por %p65, %p66
      %s68 = ssub.s32 %s27, %s39
      %p69 = scmp.eq.s32.totalorder %s68, 0
      %s71 = sadd.s32 %s70, 1
      %s72 = scalar_select %p69, %s70, %s71
      %p75 = pneg %p69
      %p76 = scmp.eq.s32.totalorder %s20, 1
      %p77 = por %p75, %p76
      %p78 = scmp.ne.s32.totalorder %s70, %s73
      %p79 = scmp.eq.s32.totalorder %s20, 0
      %p80 = por %p78, %p79
      %p81 = scmp.ne.s32.totalorder %s70, %s73
      %p82 = scmp.eq.s32.totalorder %s25, 1
      %p83 = por %p81, %p82
      %p84 = scmp.ne.s32.totalorder %s73, %s74
      %p85 = scmp.eq.s32.totalorder %s25, 0
      %p86 = por %p84, %p85
      %p87 = scmp.ne.s32.totalorder %s73, %s74
      %p88 = scmp.eq.s32.totalorder %s26, 1
      %p89 = por %p87, %p88
      %p91 = scmp.ne.s32.totalorder %s74, %s90
      %p92 = scmp.eq.s32.totalorder %s26, 0
      %p93 = por %p91, %p92
      %s95 = sadd.s32 %s94, 1
      %p98 = scmp.eq.s32.totalorder %s20, 1
      %p99 = scmp.ne.s32.totalorder %s94, %s96
      %p100 = scmp.eq.s32.totalorder %s20, 0
      %p101 = por %p99, %p100
      %p102 = scmp.ne.s32.totalorder %s94, %s96
      %p103 = scmp.eq.s32.totalorder %s25, 1
      %p104 = por %p102, %p103
      %p105 = scmp.ne.s32.totalorder %s96, %s97
      %p106 = scmp.eq.s32.totalorder %s25, 0
      %p107 = por %p105, %p106
      %p108 = scmp.ne.s32.totalorder %s96, %s97
      %p109 = scmp.eq.s32.totalorder %s26, 1
      %p110 = por %p108, %p109
      %p112 = scmp.ne.s32.totalorder %s97, %s111
      %p113 = scmp.eq.s32.totalorder %s26, 0
      %p114 = por %p112, %p113
      %s116 = sadd.s32 %s115, 1
      %p119 = scmp.eq.s32.totalorder %s20, 1
      %p120 = scmp.ne.s32.totalorder %s115, %s117
      %p121 = scmp.eq.s32.totalorder %s20, 0
      %p122 = por %p120, %p121
      %p123 = scmp.ne.s32.totalorder %s115, %s117
      %p124 = scmp.eq.s32.totalorder %s25, 1
      %p125 = por %p123, %p124
      %p126 = scmp.ne.s32.totalorder %s117, %s118
      %p127 = scmp.eq.s32.totalorder %s25, 0
      %p128 = por %p126, %p127
      %p129 = scmp.ne.s32.totalorder %s117, %s118
      %p130 = scmp.eq.s32.totalorder %s26, 1
      %p131 = por %p129, %p130
      %p133 = scmp.ne.s32.totalorder %s118, %s132
      %p134 = scmp.eq.s32.totalorder %s26, 0
      %p135 = por %p133, %p134
      %s136 = ssub.s32 %s27, %s39
      %s137 = ssub.s32 %s28, %s35
      %s138 = sor.u32 %s136, %s137
      %p139 = scmp.eq.s32.totalorder %s138, 0
      %s141 = sadd.s32 %s140, 1
      %s142 = scalar_select %p139, %s140, %s141
      %p145 = pneg %p139
      %p146 = scmp.eq.s32.totalorder %s20, 1
      %p147 = por %p145, %p146
      %p148 = scmp.ne.s32.totalorder %s140, %s143
      %p149 = scmp.eq.s32.totalorder %s20, 0
      %p150 = por %p148, %p149
      %p151 = scmp.ne.s32.totalorder %s140, %s143
      %p152 = scmp.eq.s32.totalorder %s25, 1
      %p153 = por %p151, %p152
      %p154 = scmp.ne.s32.totalorder %s143, %s144
      %p155 = scmp.eq.s32.totalorder %s25, 0
      %p156 = por %p154, %p155
      %p157 = scmp.ne.s32.totalorder %s143, %s144
      %p158 = scmp.eq.s32.totalorder %s26, 1
      %p159 = por %p157, %p158
      %p161 = scmp.ne.s32.totalorder %s144, %s160
      %p162 = scmp.eq.s32.totalorder %s26, 0
      %p163 = por %p161, %p162
      %p164 = scmp.le.s32.totalorder 1, %s20
      %p165 = scmp.lt.s32.totalorder %s20, 3
      %p166 = pnand %p164, %p165
      %p167 = pneg %p166
      // Predicated region
      $region9: #{cross_attention.2} parent=5 // pred_check
        _
      $region10: #{cross_attention.2} parent=5 // pred_check_branch
        %169 = sbr.rel (%p166) target = $region12
      $region11: #{cross_attention.2} parent=5 // pred_region
        %s170 = ssub.s32 %s20, 1
        // Predicated region
        $region13: #{cross_attention.2} parent=11 // pred_check
          %p171 = pneg %p107
        $region14: #{cross_attention.2} parent=11 // pred_check_branch
          %173 = sbr.rel (%p171) target = $region16
        $region15: #{cross_attention.2} parent=11 // pred_region
          %s175 = ssub.s32 256, 256
          %176 = vsyncadd [#allocation7], %s175
          %s177 = sshll.u32 [#allocation8], 4
          %s178 = int_to_ptr.vmem [resolvable:$true] %s177
          %183 = dma.hbm_to_vmem [thread:$0]  %s2, 256, %s178, [#allocation7], 64, 64, 4
        $region16: #{cross_attention.2} parent=11 // pred_fallthru
          _
        // Predicated region
        $region17: #{cross_attention.2} parent=11 // pred_check
          %p184 = pneg %p128
        $region18: #{cross_attention.2} parent=11 // pred_check_branch
          %186 = sbr.rel (%p184) target = $region20
        $region19: #{cross_attention.2} parent=11 // pred_region
          %s188 = ssub.s32 512, 512
          %189 = vsyncadd [#allocation10], %s188
          %s190 = sshll.u32 [#allocation9], 4
          %s191 = int_to_ptr.vmem [resolvable:$true] %s190
          %196 = dma.hbm_to_vmem [thread:$0]  %s3, 512, %s191, [#allocation10], 64, 64, 4
        $region20: #{cross_attention.2} parent=11 // pred_fallthru
          _
      $region12: #{cross_attention.2} parent=5 // pred_fallthru
        _
      %p197 = scmp.lt.s32.totalorder %s20, 2
      // Predicated region
      $region21: #{cross_attention.2} parent=5 // pred_check
        %p198 = pneg %p197
      $region22: #{cross_attention.2} parent=5 // pred_check_branch
        %200 = sbr.rel (%p198) target = $region24
      $region23: #{cross_attention.2} parent=5 // pred_region
        // Predicated region
        $region25: #{cross_attention.2} parent=23 // pred_check
          %p201 = pneg %p54
        $region26: #{cross_attention.2} parent=23 // pred_check_branch
          %203 = sbr.rel (%p201) target = $region28
        $region27: #{cross_attention.2} parent=23 // pred_region
          %s204 = sand.u32 %s44, 1
          %s205 = scalar_lea.sflag [#allocation4], %s204
          %s206 = sand.u32 %s44, 1
          %s207 = smul.addr %s206, 8
          %s208 = scalar_lea.vmem [#allocation3], %s207
          %s210 = ssub.s32 128, 128
          %211 = vsyncadd %s205, %s210
          %s212 = sadd.s32 %s28, %s27
          %s213 = smul.addr %s212, 128
          %s214 = scalar_lea.hbm %s0, %s213
          %s216 = sshll.u32 %s208, 4
          %s217 = int_to_ptr.vmem [resolvable:$true] %s216
          %219 = dma.hbm_to_vmem [thread:$0]  %s214, 128, %s217, %s205
        $region28: #{cross_attention.2} parent=23 // pred_fallthru
          _
        // Predicated region
        $region29: #{cross_attention.2} parent=23 // pred_check
          %p220 = pneg %p80
        $region30: #{cross_attention.2} parent=23 // pred_check_branch
          %222 = sbr.rel (%p220) target = $region32
        $region31: #{cross_attention.2} parent=23 // pred_region
          %s223 = sand.u32 %s20, 1
          %s224 = scalar_lea.sflag [#allocation7], %s223
          %s225 = sand.u32 %s70, 1
          %s226 = smul.addr %s225, 16
          %s227 = scalar_lea.vmem [#allocation6], %s226
          %s229 = ssub.s32 256, 256
          %230 = vsyncadd %s224, %s229
          %s231 = smul.addr %s27, 2
          %s232 = smul.addr %s231, 128
          %s233 = scalar_lea.hbm %s1, %s232
          %s234 = sshll.u32 %s227, 4
          %s235 = int_to_ptr.vmem [resolvable:$true] %s234
          %240 = dma.hbm_to_vmem [thread:$0]  %s233, 256, %s235, %s224, 128, 128, 8
        $region32: #{cross_attention.2} parent=23 // pred_fallthru
          _
      $region24: #{cross_attention.2} parent=5 // pred_fallthru
        _
      %p241 = scmp.le.s32.totalorder 1, %s20
      %p242 = scmp.lt.s32.totalorder %s20, 3
      %p243 = pnand %p241, %p242
      %p244 = pneg %p243
      // Predicated region
      $region33: #{cross_attention.2} parent=5 // pred_check
        _
      $region34: #{cross_attention.2} parent=5 // pred_check_branch
        %246 = sbr.rel (%p243) target = $region36
      $region35: #{cross_attention.2} parent=5 // pred_region
        %s247 = ssub.s32 %s20, 1
        %s248 = sand.u32 %s47, 1
        %s249 = scalar_lea.sflag [#allocation4], %s248
        %s250 = sand.u32 %s47, 1
        %s251 = smul.addr %s250, 8
        %s252 = scalar_lea.vmem [#allocation3], %s251
        // Predicated region
        $region37: #{cross_attention.2} parent=35 // pred_check
          %p253 = pneg %p60
        $region38: #{cross_attention.2} parent=35 // pred_check_branch
          %255 = sbr.rel (%p253) target = $region40
        $region39: #{cross_attention.2} parent=35 // pred_region
          %256 = dma.done %s249, 128
        $region40: #{cross_attention.2} parent=35 // pred_fallthru
          _
        %s257 = sand.u32 %s25, 1
        %s258 = scalar_lea.sflag [#allocation7], %s257
        %s259 = sand.u32 %s73, 1
        %s260 = smul.addr %s259, 16
        %s261 = scalar_lea.vmem [#allocation6], %s260
        // Predicated region
        $region41: #{cross_attention.2} parent=35 // pred_check
          %p262 = pneg %p86
        $region42: #{cross_attention.2} parent=35 // pred_check_branch
          %264 = sbr.rel (%p262) target = $region44
        $region43: #{cross_attention.2} parent=35 // pred_region
          %265 = dma.done %s258, 256
        $region44: #{cross_attention.2} parent=35 // pred_fallthru
          _
        // Predicated region
        $region45: #{cross_attention.2} parent=35 // pred_check
          %p266 = pneg %p107
        $region46: #{cross_attention.2} parent=35 // pred_check_branch
          %268 = sbr.rel (%p266) target = $region48
        $region47: #{cross_attention.2} parent=35 // pred_region
          %269 = dma.done [#allocation7], 256
        $region48: #{cross_attention.2} parent=35 // pred_fallthru
          _
        // Predicated region
        $region49: #{cross_attention.2} parent=35 // pred_check
          %p270 = pneg %p128
        $region50: #{cross_attention.2} parent=35 // pred_check_branch
          %272 = sbr.rel (%p270) target = $region52
        $region51: #{cross_attention.2} parent=35 // pred_region
          %273 = dma.done [#allocation10], 512
        $region52: #{cross_attention.2} parent=35 // pred_fallthru
          _
        %s274 = sand.u32 %s47, 1
        %s275 = scalar_lea.sflag [#allocation4], %s274
        %s276 = sand.u32 %s47, 1
        %s277 = smul.addr %s276, 8
        %s278 = scalar_lea.vmem [#allocation3], %s277
        %p279 = pneg %p60
        %p280 = pneg %p57
        %s281 = sand.u32 %s25, 1
        %s282 = scalar_lea.sflag [#allocation7], %s281
        %s283 = sand.u32 %s73, 1
        %s284 = smul.addr %s283, 16
        %s285 = scalar_lea.vmem [#allocation6], %s284
        %p286 = pneg %p86
        %p287 = pneg %p83
        %p288 = pneg %p107
        %p289 = pneg %p104
        %p290 = pneg %p128
        %p291 = pneg %p125
        %p292 = pneg %p156
        %p293 = pneg %p153
        %s294 = sand.u32 %s143, 1
        %s295 = scalar_lea.sflag [#allocation5], %s294
        %s296 = sand.u32 %s143, 1
        %s297 = smul.addr %s296, 16
        %s298 = scalar_lea.vmem [#allocation11], %s297
        %p300 = scmp.eq.s32.totalorder %s30, 0
        // Predicated region
        $region53: #{cross_attention.2} parent=35 // pred_check
          %p301 = pneg %p300
        $region54: #{cross_attention.2} parent=35 // pred_check_branch
          %303 = sbr.rel (%p301) target = $region56
        $region55: #{cross_attention.2} parent=35 // pred_region
          %v304 = vld [vmem:[%s261] sm:$0xff]
          %v305 = vld [vmem:[%s261 + $0x8] sm:$0xff]
          %v306 = vpack.c.bf16 %v305, %v304
          %v307 = vld [vmem:[#allocation9] sm:$0xf]
          %v308 = vld [vmem:[#allocation9 + $0x4] sm:$0xf]
          %v309 = vld [vmem:[#allocation9 + $0x8] sm:$0xf]
          %v310 = vld [vmem:[#allocation9 + $0xc] sm:$0xf]
          %v311 = vld [vmem:[#allocation9 + $0x10] sm:$0xf]
          %v312 = vld [vmem:[#allocation9 + $0x14] sm:$0xf]
          %v313 = vld [vmem:[#allocation9 + $0x18] sm:$0xf]
          %v314 = vld [vmem:[#allocation9 + $0x1c] sm:$0xf]
          %v323 = vunpack.c.l.b16 %v307
          %v324 = vunpack.c.l.b16 %v308
          %v325 = vunpack.c.l.b16 %v309
          %v326 = vunpack.c.l.b16 %v310
          %v327 = vunpack.c.l.b16 %v311
          %v328 = vunpack.c.l.b16 %v312
          %v329 = vunpack.c.l.b16 %v313
          %v330 = vunpack.c.l.b16 %v314
          %v331 = vpack.c.b16 %v324, %v323
          %v332 = vpack.c.b16 %v326, %v325
          %v333 = vpack.c.b16 %v328, %v327
          %v334 = vpack.c.b16 %v330, %v329
          %vm335 = vcmask 261120
          %v337 = vsel %vm335, %v331, 0
          %v340 = vsel %vm335, %v332, 0
          %v343 = vsel %vm335, %v333, 0
          %v346 = vsel %vm335, %v334, 0
          %v349 = vsel %vm335, %v306, 0
          %351 = vmatprep.subr.bf16.mxu0 0
          %352 = vmatpush1.bf16.xpose.msra.mxu0 %v349
          %353 = vmatprep.subr.bf16.mxu0 0
          %354 = vmatpush1.bf16.xpose.msra.mxu0 0
          %355 = vmatprep.subr.bf16.mxu0 0
          %356 = vmatpush1.bf16.xpose.msra.mxu0 0
          %357 = vmatprep.subr.bf16.mxu0 0
          %358 = vmatpush1.bf16.xpose.msra.mxu0 0
          %359 = vmatprep.subr.bf16.mxu0 0
          %360 = vmatpush1.bf16.xpose.msra.mxu0 0
          %361 = vmatprep.subr.bf16.mxu0 0
          %362 = vmatpush1.bf16.xpose.msra.mxu0 0
          %363 = vmatprep.subr.bf16.mxu0 0
          %364 = vmatpush1.bf16.xpose.msra.mxu0 0
          %365 = vmatprep.subr.bf16.mxu0 0
          %366 = vmatpush1.bf16.xpose.msra.mxu0 0
          %367 = vmatprep.subr.bf16.mxu0 0
          %368 = vmatpush1.bf16.xpose.msra.mxu0 0
          %369 = vmatprep.subr.bf16.mxu0 0
          %370 = vmatpush1.bf16.xpose.msra.mxu0 0
          %371 = vmatprep.subr.bf16.mxu0 0
          %372 = vmatpush1.bf16.xpose.msra.mxu0 0
          %373 = vmatprep.subr.bf16.mxu0 0
          %374 = vmatpush1.bf16.xpose.msra.mxu0 0
          %375 = vmatprep.subr.bf16.mxu0 0
          %376 = vmatpush1.bf16.xpose.msra.mxu0 0
          %377 = vmatprep.subr.bf16.mxu0 0
          %378 = vmatpush1.bf16.xpose.msra.mxu0 0
          %379 = vmatprep.subr.bf16.mxu0 0
          %380 = vmatpush1.bf16.xpose.msra.mxu0 0
          %381 = vmatprep.subr.bf16.mxu0 0
          %382 = vmatpush1.bf16.xpose.msra.mxu0 0
          %383 = vmatprep.mubr.bf16.mxu0 0
          %384 = vmatmul.mubr.bf16.gmra.mrb[0].mxu0 %v337
          %v385 = vpop.f32.mrb[0].mxu0
          %v386 = vadd.f32 0.0, %v385
          %v387 = vpop.f32.mrb[0].mxu0
          %v388 = vpop.f32.mrb[0].mxu0
          %v389 = vadd.f32 0.0, %v388
          %v390 = vpop.f32.mrb[0].mxu0
          %391 = vmatprep.mubr.bf16.mxu0 0
          %392 = vmatmul.mubr.bf16.gmra.mrb[0].mxu0 %v340
          %v393 = vpop.f32.mrb[0].mxu0
          %v394 = vadd.f32 0.0, %v393
          %v395 = vpop.f32.mrb[0].mxu0
          %v396 = vpop.f32.mrb[0].mxu0
          %v397 = vadd.f32 0.0, %v396
          %v398 = vpop.f32.mrb[0].mxu0
          %399 = vmatprep.mubr.bf16.mxu0 0
          %400 = vmatmul.mubr.bf16.gmra.mrb[0].mxu0 %v343
          %v401 = vpop.f32.mrb[0].mxu0
          %v402 = vadd.f32 0.0, %v401
          %v403 = vpop.f32.mrb[0].mxu0
          %v404 = vpop.f32.mrb[0].mxu0
          %v405 = vadd.f32 0.0, %v404
          %v406 = vpop.f32.mrb[0].mxu0
          %407 = vmatprep.mubr.bf16.mxu0 0
          %408 = vmatmul.mubr.bf16.gmra.mrb[0].mxu0 %v346
          %v409 = vpop.f32.mrb[0].mxu0
          %v410 = vadd.f32 0.0, %v409
          %v411 = vpop.f32.mrb[0].mxu0
          %v412 = vpop.f32.mrb[0].mxu0
          %v413 = vadd.f32 0.0, %v412
          %v414 = vpop.f32.mrb[0].mxu0
          %415 = vdwg.mxu0
          %v416 = vpack.c.bf16 %v389, %v386
          %v417 = vpack.c.bf16 %v397, %v394
          %v418 = vpack.c.bf16 %v405, %v402
          %v419 = vpack.c.bf16 %v413, %v410
          %vm420 = vcmask 130048
          %421 = vst.msk [vmem:[#allocation2] sm:$0xff] %vm420, %v416
          %422 = vst.msk [vmem:[#allocation2 + $0x8] sm:$0xff] %vm420, %v417
          %423 = vst.msk [vmem:[#allocation2 + $0x10] sm:$0xff] %vm420, %v418
          %424 = vst.msk [vmem:[#allocation2 + $0x18] sm:$0xff] %vm420, %v419
        $region56: #{cross_attention.2} parent=35 // pred_fallthru
          _
        %v425 = vld [vmem:[#allocation2] sm:$0xff]
        %v426 = vld [vmem:[#allocation2 + $0x8] sm:$0xff]
        %v427 = vld [vmem:[#allocation2 + $0x10] sm:$0xff]
        %v428 = vld [vmem:[#allocation2 + $0x18] sm:$0xff]
        %v429 = vld [vmem:[%s252] sm:$0xff]
        %v430 = vpack.c.bf16 %v429, %v429
        %v431 = vld [vmem:[#allocation8] sm:$0xf]
        %v432 = vld [vmem:[#allocation8 + $0x4] sm:$0xf]
        %v433 = vld [vmem:[#allocation8 + $0x8] sm:$0xf]
        %v434 = vld [vmem:[#allocation8 + $0xc] sm:$0xf]
        %v439 = vunpack.c.l.b16 %v431
        %v440 = vunpack.c.l.b16 %v432
        %v441 = vunpack.c.l.b16 %v433
        %v442 = vunpack.c.l.b16 %v434
        %v443 = vpack.c.b16 %v440, %v439
        %v444 = vpack.c.b16 %v442, %v441
        %vm445 = vcmask 261120
        %v447 = vsel %vm445, %v430, 0
        %v450 = vsel %vm445, %v443, 0
        %v453 = vsel %vm445, %v444, 0
        %455 = vmatprep.subr.bf16.mxu0 0
        %456 = vmatpush1.bf16.xpose.msra.mxu0 %v450
        %457 = vmatprep.subr.bf16.mxu0 0
        %458 = vmatpush1.bf16.xpose.msra.mxu0 %v453
        %459 = vmatprep.subr.bf16.mxu0 0
        %460 = vmatpush1.bf16.xpose.msra.mxu0 0
        %461 = vmatprep.subr.bf16.mxu0 0
        %462 = vmatpush1.bf16.xpose.msra.mxu0 0
        %463 = vmatprep.subr.bf16.mxu0 0
        %464 = vmatpush1.bf16.xpose.msra.mxu0 0
        %465 = vmatprep.subr.bf16.mxu0 0
        %466 = vmatpush1.bf16.xpose.msra.mxu0 0
        %467 = vmatprep.subr.bf16.mxu0 0
        %468 = vmatpush1.bf16.xpose.msra.mxu0 0
        %469 = vmatprep.subr.bf16.mxu0 0
        %470 = vmatpush1.bf16.xpose.msra.mxu0 0
        %471 = vmatprep.subr.bf16.mxu0 0
        %472 = vmatpush1.bf16.xpose.msra.mxu0 0
        %473 = vmatprep.subr.bf16.mxu0 0
        %474 = vmatpush1.bf16.xpose.msra.mxu0 0
        %475 = vmatprep.subr.bf16.mxu0 0
        %476 = vmatpush1.bf16.xpose.msra.mxu0 0
        %477 = vmatprep.subr.bf16.mxu0 0
        %478 = vmatpush1.bf16.xpose.msra.mxu0 0
        %479 = vmatprep.subr.bf16.mxu0 0
        %480 = vmatpush1.bf16.xpose.msra.mxu0 0
        %481 = vmatprep.subr.bf16.mxu0 0
        %482 = vmatpush1.bf16.xpose.msra.mxu0 0
        %483 = vmatprep.subr.bf16.mxu0 0
        %484 = vmatpush1.bf16.xpose.msra.mxu0 0
        %485 = vmatprep.subr.bf16.mxu0 0
        %486 = vmatpush1.bf16.xpose.msra.mxu0 0
        %487 = vmatprep.mubr.bf16.mxu0 0
        %488 = vmatmul.mubr.bf16.gmra.mrb[0].mxu0 %v447
        %v489 = vpop.f32.mrb[0].mxu0
        %v490 = vadd.f32 0.0, %v489
        %v491 = vpop.f32.mrb[0].mxu0
        %v492 = vpop.f32.mrb[0].mxu0
        %v493 = vpop.f32.mrb[0].mxu0
        %494 = vdwg.mxu0
        %v495 = vmul.f32 %v490, 0.5
        %v496 = vpack.c.bf16 %v495, %v495
        %v498 = vsel %vm445, %v496, 0
        %500 = vmatprep.subr.bf16.mxu0 0
        %501 = vmatpush1.bf16.msra.mxu0 %v425
        %502 = vmatprep.subr.bf16.mxu0 0
        %503 = vmatpush1.bf16.msra.mxu0 %v426
        %504 = vmatprep.subr.bf16.mxu0 0
        %505 = vmatpush1.bf16.msra.mxu0 0
        %506 = vmatprep.subr.bf16.mxu0 0
        %507 = vmatpush1.bf16.msra.mxu0 0
        %508 = vmatprep.subr.bf16.mxu0 0
        %509 = vmatpush1.bf16.msra.mxu0 0
        %510 = vmatprep.subr.bf16.mxu0 0
        %511 = vmatpush1.bf16.msra.mxu0 0
        %512 = vmatprep.subr.bf16.mxu0 0
        %513 = vmatpush1.bf16.msra.mxu0 0
        %514 = vmatprep.subr.bf16.mxu0 0
        %515 = vmatpush1.bf16.msra.mxu0 0
        %516 = vmatprep.subr.bf16.mxu0 0
        %517 = vmatpush1.bf16.msra.mxu0 0
        %518 = vmatprep.subr.bf16.mxu0 0
        %519 = vmatpush1.bf16.msra.mxu0 0
        %520 = vmatprep.subr.bf16.mxu0 0
        %521 = vmatpush1.bf16.msra.mxu0 0
        %522 = vmatprep.subr.bf16.mxu0 0
        %523 = vmatpush1.bf16.msra.mxu0 0
        %524 = vmatprep.subr.bf16.mxu0 0
        %525 = vmatpush1.bf16.msra.mxu0 0
        %526 = vmatprep.subr.bf16.mxu0 0
        %527 = vmatpush1.bf16.msra.mxu0 0
        %528 = vmatprep.subr.bf16.mxu0 0
        %529 = vmatpush1.bf16.msra.mxu0 0
        %530 = vmatprep.subr.bf16.mxu0 0
        %531 = vmatpush1.bf16.msra.mxu0 0
        %532 = vmatprep.mubr.bf16.mxu0 0
        %533 = vmatmul.mubr.bf16.gmra.mrb[0].mxu0 %v498
        %v534 = vpop.f32.mrb[0].mxu0
        %v535 = vadd.f32 0.0, %v534
        %v536 = vpop.f32.mrb[0].mxu0
        %v537 = vpop.f32.mrb[0].mxu0
        %v538 = vpop.f32.mrb[0].mxu0
        %539 = vdwg.mxu0
        %vm540 = vcmask 130048
        %v541 = vsel %vm540, %v535, -inf
        %542 = vmax.xlane.f32.xlu0 %v541
        %v543 = vpop.xlane.xlu0 %542
        %v544 = vsub.f32 %v535, %v543
        %v545 = vmul.f32 %v544, 1.442695
        %v546 = vpow.pop %v545
        %v548 = vsel %vm540, 1.0, 0
        %v551 = vsel %vm540, %v546, 0
        %553 = vmatprep.subr.mxu0 0.0
        %554 = vmatpush1.xpose.msra.mxu0 %v551
        %555 = vmatprep.subr.mxu0 0.0
        %556 = vmatpush1.xpose.msra.mxu0 0.0
        %557 = vmatprep.subr.mxu0 0.0
        %558 = vmatpush1.xpose.msra.mxu0 0.0
        %559 = vmatprep.subr.mxu0 0.0
        %560 = vmatpush1.xpose.msra.mxu0 0.0
        %561 = vmatprep.subr.mxu0 0.0
        %562 = vmatpush1.xpose.msra.mxu0 0.0
        %563 = vmatprep.subr.mxu0 0.0
        %564 = vmatpush1.xpose.msra.mxu0 0.0
        %565 = vmatprep.subr.mxu0 0.0
        %566 = vmatpush1.xpose.msra.mxu0 0.0
        %567 = vmatprep.subr.mxu0 0.0
        %568 = vmatpush1.xpose.msra.mxu0 0.0
        %569 = vmatprep.subr.mxu0 0.0
        %570 = vmatpush1.xpose.msra.mxu0 0.0
        %571 = vmatprep.subr.mxu0 0.0
        %572 = vmatpush1.xpose.msra.mxu0 0.0
        %573 = vmatprep.subr.mxu0 0.0
        %574 = vmatpush1.xpose.msra.mxu0 0.0
        %575 = vmatprep.subr.mxu0 0.0
        %576 = vmatpush1.xpose.msra.mxu0 0.0
        %577 = vmatprep.subr.mxu0 0.0
        %578 = vmatpush1.xpose.msra.mxu0 0.0
        %579 = vmatprep.subr.mxu0 0.0
        %580 = vmatpush1.xpose.msra.mxu0 0.0
        %581 = vmatprep.subr.mxu0 0.0
        %582 = vmatpush1.xpose.msra.mxu0 0.0
        %583 = vmatprep.subr.mxu0 0.0
        %584 = vmatpush1.xpose.msra.mxu0 0.0
        %585 = vmatprep.subr.mxu0 0.0
        %586 = vmatpush1.xpose.msra.mxu0 0.0
        %587 = vmatprep.subr.mxu0 0.0
        %588 = vmatpush1.xpose.msra.mxu0 0.0
        %589 = vmatprep.subr.mxu0 0.0
        %590 = vmatpush1.xpose.msra.mxu0 0.0
        %591 = vmatprep.subr.mxu0 0.0
        %592 = vmatpush1.xpose.msra.mxu0 0.0
        %593 = vmatprep.subr.mxu0 0.0
        %594 = vmatpush1.xpose.msra.mxu0 0.0
        %595 = vmatprep.subr.mxu0 0.0
        %596 = vmatpush1.xpose.msra.mxu0 0.0
        %597 = vmatprep.subr.mxu0 0.0
        %598 = vmatpush1.xpose.msra.mxu0 0.0
        %599 = vmatprep.subr.mxu0 0.0
        %600 = vmatpush1.xpose.msra.mxu0 0.0
        %601 = vmatprep.subr.mxu0 0.0
        %602 = vmatpush1.xpose.msra.mxu0 0.0
        %603 = vmatprep.subr.mxu0 0.0
        %604 = vmatpush1.xpose.msra.mxu0 0.0
        %605 = vmatprep.subr.mxu0 0.0
        %606 = vmatpush1.xpose.msra.mxu0 0.0
        %607 = vmatprep.subr.mxu0 0.0
        %608 = vmatpush1.xpose.msra.mxu0 0.0
        %609 = vmatprep.subr.mxu0 0.0
        %610 = vmatpush1.xpose.msra.mxu0 0.0
        %611 = vmatprep.subr.mxu0 0.0
        %612 = vmatpush1.xpose.msra.mxu0 0.0
        %613 = vmatprep.subr.mxu0 0.0
        %614 = vmatpush1.xpose.msra.mxu0 0.0
        %615 = vmatprep.subr.mxu0 0.0
        %616 = vmatpush1.xpose.msra.mxu0 0.0
        %617 = vmatprep.mubr.f32.mxu0 0.0
        %618 = vmatmul.mubr.f32.gmra.mrb[0].mxu0 %v548
        %v619 = vpop.f32.mrb[0].mxu0
        %v620 = vadd.f32 0.0, %v619
        %v621 = vpop.f32.mrb[0].mxu0
        %622 = vdwg.mxu0
        %v623 = vrcp.pop %v620
        %v624 = vmul.f32 %v620, %v623
        %v625 = vsub.f32 2.0, %v624
        %v626 = vmul.f32 %v623, %v625
        %v627 = vpack.c.bf16 %v546, %v546
        %v629 = vsel %vm540, %v427, 0
        %v632 = vsel %vm540, %v428, 0
        %v635 = vsel %vm540, %v627, 0
        %637 = vmatprep.subr.bf16.mxu0 0
        %638 = vmatpush1.bf16.xpose.msra.mxu0 %v635
        %639 = vmatprep.subr.bf16.mxu0 0
        %640 = vmatpush1.bf16.xpose.msra.mxu0 0
        %641 = vmatprep.subr.bf16.mxu0 0
        %642 = vmatpush1.bf16.xpose.msra.mxu0 0
        %643 = vmatprep.subr.bf16.mxu0 0
        %644 = vmatpush1.bf16.xpose.msra.mxu0 0
        %645 = vmatprep.subr.bf16.mxu0 0
        %646 = vmatpush1.bf16.xpose.msra.mxu0 0
        %647 = vmatprep.subr.bf16.mxu0 0
        %648 = vmatpush1.bf16.xpose.msra.mxu0 0
        %649 = vmatprep.subr.bf16.mxu0 0
        %650 = vmatpush1.bf16.xpose.msra.mxu0 0
        %651 = vmatprep.subr.bf16.mxu0 0
        %652 = vmatpush1.bf16.xpose.msra.mxu0 0
        %653 = vmatprep.subr.bf16.mxu0 0
        %654 = vmatpush1.bf16.xpose.msra.mxu0 0
        %655 = vmatprep.subr.bf16.mxu0 0
        %656 = vmatpush1.bf16.xpose.msra.mxu0 0
        %657 = vmatprep.subr.bf16.mxu0 0
        %658 = vmatpush1.bf16.xpose.msra.mxu0 0
        %659 = vmatprep.subr.bf16.mxu0 0
        %660 = vmatpush1.bf16.xpose.msra.mxu0 0
        %661 = vmatprep.subr.bf16.mxu0 0
        %662 = vmatpush1.bf16.xpose.msra.mxu0 0
        %663 = vmatprep.subr.bf16.mxu0 0
        %664 = vmatpush1.bf16.xpose.msra.mxu0 0
        %665 = vmatprep.subr.bf16.mxu0 0
        %666 = vmatpush1.bf16.xpose.msra.mxu0 0
        %667 = vmatprep.subr.bf16.mxu0 0
        %668 = vmatpush1.bf16.xpose.msra.mxu0 0
        %669 = vmatprep.mubr.bf16.mxu0 0
        %670 = vmatmul.mubr.bf16.gmra.mrb[0].mxu0 %v629
        %v671 = vpop.f32.mrb[0].mxu0
        %v672 = vadd.f32 0.0, %v671
        %v673 = vpop.f32.mrb[0].mxu0
        %v674 = vpop.f32.mrb[0].mxu0
        %v675 = vadd.f32 0.0, %v674
        %v676 = vpop.f32.mrb[0].mxu0
        %677 = vmatprep.mubr.bf16.mxu0 0
        %678 = vmatmul.mubr.bf16.gmra.mrb[0].mxu0 %v632
        %v679 = vpop.f32.mrb[0].mxu0
        %v680 = vadd.f32 0.0, %v679
        %v681 = vpop.f32.mrb[0].mxu0
        %v682 = vpop.f32.mrb[0].mxu0
        %v683 = vadd.f32 0.0, %v682
        %v684 = vpop.f32.mrb[0].mxu0
        %685 = vdwg.mxu0
        %v686 = vlaneseq
        %v687 = vshrl.u32 %v686, 7
        %v688 = vsub.s32 0, %v687
        %v689 = vrot.slane %v626, %v688
        %v690 = vmul.f32 %v672, %v689
        %v691 = vmul.f32 %v675, %v689
        %v692 = vmul.f32 %v680, %v689
        %v693 = vmul.f32 %v683, %v689
        %v694 = vpack.c.bf16 %v691, %v690
        %v695 = vpack.c.bf16 %v693, %v692
        %v698 = vunpack.c.l.b16 %v694
        %v699 = vunpack.c.h.b16 %v694
        %v700 = vunpack.c.l.b16 %v695
        %v701 = vunpack.c.h.b16 %v695
        %v702 = vpack.c.b16 %v698, %v698
        %v703 = vpack.c.b16 %v699, %v699
        %v704 = vpack.c.b16 %v700, %v700
        %v705 = vpack.c.b16 %v701, %v701
        %vm710 = vcmask 60416
        %711 = vst.msk [vmem:[%s298] sm:$0xf] %vm710, %v702
        %712 = vst.msk [vmem:[%s298 + $0x4] sm:$0xf] %vm710, %v703
        %713 = vst.msk [vmem:[%s298 + $0x8] sm:$0xf] %vm710, %v704
        %714 = vst.msk [vmem:[%s298 + $0xc] sm:$0xf] %vm710, %v705
        %s715 = sand.u32 %s143, 1
        %s716 = scalar_lea.sflag [#allocation5], %s715
        %s717 = sand.u32 %s143, 1
        %s718 = smul.addr %s717, 16
        %s719 = scalar_lea.vmem [#allocation11], %s718
        // Predicated region
        $region57: #{cross_attention.2} parent=35 // pred_check
          %p720 = pneg %p153
        $region58: #{cross_attention.2} parent=35 // pred_check_branch
          %722 = sbr.rel (%p720) target = $region60
        $region59: #{cross_attention.2} parent=35 // pred_region
          %s724 = ssub.s32 256, 256
          %725 = vsyncadd %s716, %s724
          %s726 = smul.addr %s29, 4
          %s727 = sadd.s32 %s30, %s726
          %s728 = smul.addr %s727, 64
          %s729 = scalar_lea.hbm %s4, %s728
          %s730 = sshll.u32 %s719, 4
          %s731 = int_to_ptr.vmem [resolvable:$true] %s730
          %736 = dma.vmem_to_hbm [thread:$0]  %s731, 256, %s729, %s716, 64, 64, 4
        $region60: #{cross_attention.2} parent=35 // pred_fallthru
          _
      $region36: #{cross_attention.2} parent=5 // pred_fallthru
        _
      %p737 = scmp.le.s32.totalorder 2, %s20
      // Predicated region
      $region61: #{cross_attention.2} parent=5 // pred_check
        %p738 = pneg %p737
      $region62: #{cross_attention.2} parent=5 // pred_check_branch
        %740 = sbr.rel (%p738) target = $region64
      $region63: #{cross_attention.2} parent=5 // pred_region
        %s741 = ssub.s32 %s20, 2
        // Predicated region
        $region65: #{cross_attention.2} parent=63 // pred_check
          %p742 = pneg %p159
        $region66: #{cross_attention.2} parent=63 // pred_check_branch
          %744 = sbr.rel (%p742) target = $region68
        $region67: #{cross_attention.2} parent=63 // pred_region
          %s745 = sand.u32 %s144, 1
          %s746 = scalar_lea.sflag [#allocation5], %s745
          %s747 = sand.u32 %s144, 1
          %s748 = smul.addr %s747, 16
          %s749 = scalar_lea.vmem [#allocation11], %s748
          %750 = dma.done %s746, 256
        $region68: #{cross_attention.2} parent=63 // pred_fallthru
          _
      $region64: #{cross_attention.2} parent=5 // pred_fallthru
        _
    $region6: #{cross_attention.2} parent=1 // loop_footer
      %s24 = sadd.s32 1, %s20
    $region7: #{cross_attention.2} parent=1 // loop_footer_branch
      %19 = sbr.rel target = $region3
    $region8: #{cross_attention.2} parent=1 // loop_exit
      _
    %751 = vsyncpa [#allocation4], 1
    %s752 = scalar_lea.sflag [#allocation4], 1
    %753 = vsyncpa %s752, 1
    %754 = vsyncpa [#allocation7], 1
    %s755 = scalar_lea.sflag [#allocation7], 1
    %756 = vsyncpa %s755, 1
    %757 = vsyncpa [#allocation10], 1
    %758 = vsyncpa [#allocation5], 1
    %s759 = scalar_lea.sflag [#allocation5], 1
    %760 = vsyncpa %s759, 1

</llo_original>
